<compile_context>
chip_gen: v5e
topology: v5e:2x2
jax: 0.10.0
libtpu: 0.0.40
codegen_flags: <defaults>
</compile_context>

<pallas_src>
import jax
import jax.numpy as jnp
from jax.experimental import pallas as pl
from jax.experimental.pallas import tpu as pltpu


# --------------------------------------------------------------------------
# Pallas kernel
# --------------------------------------------------------------------------
def _basicblock_kernel(
    x_ref,                                   # (N, H, W*Cp)  channel-padded input rows
    band0_ref,                               # (3, W*Cp, W*Cout)  shortcut conv3x3
    band1_ref,                               # (3, W*Cp, W*Cp)    conv1x3_1 + conv3x1_1
    band2_ref,                               # (3, W*Cp, W*Cp)    conv1x3_2 + conv3x1_2
    band3_ref,                               # (3, W*Cp, W*Cout)  conv1x1 + depthwise 3x3
    gam0_ref, bet0_ref,                      # (1, Cout)   norm0
    gam1_ref, bet1_ref,                      # (1, Cp)     norm1 (channel-padded)
    gam2_ref, bet2_ref,                      # (1, Cp)     norm2 (channel-padded)
    gam3_ref, bet3_ref,                      # (1, Cout)   norm3
    gsum_out_ref, gbc_out_ref,               # (W*Cout, Cout) / (Cout, W*Cout)
    gsum_p_ref, gbc_p_ref,                   # (W*Cp, Cp)     / (Cp, W*Cp)
    out_ref,                                 # (N*H, W*Cout)  lane-dense output
    pad_ref,                                 # (N, H+2, W*Cp) scratch, reused by all stages
    id_ref,                                  # (N*H, W*Cout)  scratch, shortcut staging
):
    N, H, WCp = x_ref.shape
    NH = N * H
    W = gsum_out_ref.shape[0] // gsum_out_ref.shape[1]
    eps = 1e-5
    inv_cnt = 1.0 / float(NH * W)            # per-channel sample count = N*H*W

    def bn_fold(acc, gam_ref, bet_ref, gsum_ref, gbc_ref):
        # Training-mode BatchNorm folded into one per-channel scale/bias.
        # Stats come from a single pass (sum, sum-of-squares).  The lane axis
        # holds W interleaved copies of the channel axis, so a 0/1 matrix
        # (gsum) reduces over the W groups and its transpose (gbc) broadcasts
        # the per-channel scale/bias back to the lane layout -- both as tiny
        # matmuls, avoiding cross-lane reshapes.
        s = jnp.sum(acc, axis=0, keepdims=True)                     # (1, W*C)
        s2 = jnp.sum(acc * acc, axis=0, keepdims=True)              # (1, W*C)
        mean = jnp.dot(s, gsum_ref[...],
                       preferred_element_type=jnp.float32) * inv_cnt   # (1, C)
        ex2 = jnp.dot(s2, gsum_ref[...],
                      preferred_element_type=jnp.float32) * inv_cnt
        var = ex2 - mean * mean
        scale = gam_ref[...] * jax.lax.rsqrt(var + eps)             # (1, C)
        bias = bet_ref[...] - mean * scale
        scale_l = jnp.dot(scale, gbc_ref[...],
                          preferred_element_type=jnp.float32)       # (1, W*C)
        bias_l = jnp.dot(bias, gbc_ref[...],
                         preferred_element_type=jnp.float32)
        return acc * scale_l + bias_l

    def conv_band(band_ref):
        # 3x3-equivalent conv as 3 lane-dense matmuls: the W-direction taps
        # and W zero-padding are baked into the (W*Ci, W*Co) band matrices;
        # the H-direction taps are row shifts of the H-padded scratch.
        n_out = band_ref.shape[-1]
        acc = jnp.zeros((NH, n_out), jnp.float32)
        for kh in range(3):
            tap = pad_ref[:, kh:kh + H, :].reshape(NH, WCp)
            acc = acc + jnp.dot(tap, band_ref[kh],
                                preferred_element_type=jnp.float32)
        return acc

    # ---- halo rows: zero once; every stage only rewrites the interior ----
    zero_row = jnp.zeros((N, 1, WCp), jnp.float32)
    pad_ref[:, 0:1, :] = zero_row
    pad_ref[:, H + 1:H + 2, :] = zero_row

    # ---- input rows into the interior ----
    pad_ref[:, 1:H + 1, :] = x_ref[...]

    # ---- shortcut: identity = norm0(conv3x3(x))  (staged to VMEM) ----
    # ---- stage 1:  h1 = relu(norm1(conv1x3_1(x) + conv3x1_1(x))) ----
    id_pre = conv_band(band0_ref)                                   # (NH, W*Cout)
    pre1 = conv_band(band1_ref)                                     # (NH, W*Cp)
    id_ref[...] = bn_fold(id_pre, gam0_ref, bet0_ref, gsum_out_ref, gbc_out_ref)
    h1 = jnp.maximum(bn_fold(pre1, gam1_ref, bet1_ref, gsum_p_ref, gbc_p_ref), 0.0)
    pad_ref[:, 1:H + 1, :] = h1.reshape(N, H, WCp)

    # ---- stage 2: h2 = relu(norm2(conv1x3_2(h1) + conv3x1_2(h1))) ----
    pre2 = conv_band(band2_ref)                                     # (NH, W*Cp)
    h2 = jnp.maximum(bn_fold(pre2, gam2_ref, bet2_ref, gsum_p_ref, gbc_p_ref), 0.0)
    pad_ref[:, 1:H + 1, :] = h2.reshape(N, H, WCp)

    # ---- stage 3: out = relu(identity + norm3(conv1x1(h2) + dwconv3x3(h2))) ----
    pre3 = conv_band(band3_ref)                                     # (NH, W*Cout)
    y = id_ref[...] + bn_fold(pre3, gam3_ref, bet3_ref, gsum_out_ref, gbc_out_ref)
    out_ref[...] = jnp.maximum(y, 0.0)


# --------------------------------------------------------------------------
# Wrapper: weight folding + pallas_call
# --------------------------------------------------------------------------
def _pad_to(a, axis, size):
    if a.shape[axis] == size:
        return a
    pad = [(0, 0)] * a.ndim
    pad[axis] = (0, size - a.shape[axis])
    return jnp.pad(a, pad)


def _band_from_full(wfull, W):
    """wfull: (3, 3, Ci, Co) 3x3-frame weight -> band (3, W*Ci, W*Co).

    band[kh, w_in*Ci+ci, w_out*Co+co] = wfull[kh, w_in-w_out+1, ci, co] when
    |w_in - w_out| <= 1, else 0 -- i.e. the W direction of a padding-1 conv
    expressed as a block-banded matrix (zero padding baked in).
    """
    _, _, Ci, Co = wfull.shape
    w_in = jnp.arange(W)[:, None]
    w_out = jnp.arange(W)[None, :]
    kw = w_in - w_out + 1
    valid = ((kw >= 0) & (kw <= 2)).astype(wfull.dtype)
    kw_c = jnp.clip(kw, 0, 2)
    blocks = wfull[:, kw_c] * valid[None, :, :, None, None]   # (3, W, W, Ci, Co)
    return jnp.transpose(blocks, (0, 1, 3, 2, 4)).reshape(3, W * Ci, W * Co)


def basicblock_forward(x_nchw, p, cin, cout, mid):
    """Pallas forward. x_nchw: (N, Cin, H, W) float32. Returns (N, Cout, H, W)."""
    N, C, H, W = x_nchw.shape
    assert C == cin
    cp = max(cin, mid, cout)        # shared channel width inside the reused scratch
    f32 = jnp.float32

    # ---- input -> lane-dense (N, H, W*cp) rows (channels zero-padded to cp) ----
    x_rows = jnp.transpose(x_nchw, (0, 2, 3, 1)).astype(f32)          # (N,H,W,cin)
    x_rows = _pad_to(x_rows, 3, cp).reshape(N, H, W * cp)

    # ---- fold every conv into a 3x3-frame weight (kh, kw, ci, co) ----
    wf0 = jnp.transpose(p["w0"], (2, 3, 1, 0)).astype(f32)            # shortcut 3x3

    wf1 = jnp.zeros((3, 3, cin, mid), f32)                            # conv1x3_1 + conv3x1_1
    wf1 = wf1.at[1].add(jnp.transpose(p["w13_1"][:, :, 0, :], (2, 1, 0)))    # 1x3 -> kh=1
    wf1 = wf1.at[:, 1].add(jnp.transpose(p["w31_1"][:, :, :, 0], (2, 1, 0)))  # 3x1 -> kw=1

    wf2 = jnp.zeros((3, 3, mid, cout), f32)                           # conv1x3_2 + conv3x1_2
    wf2 = wf2.at[1].add(jnp.transpose(p["w13_2"][:, :, 0, :], (2, 1, 0)))
    wf2 = wf2.at[:, 1].add(jnp.transpose(p["w31_2"][:, :, :, 0], (2, 1, 0)))

    dw = jnp.transpose(p["wdw"][:, 0, :, :], (1, 2, 0)).astype(f32)   # (3,3,cout)
    wf3 = dw[:, :, None, :] * jnp.eye(cout, dtype=f32)[None, None]    # depthwise 3x3
    wf3 = wf3.at[1, 1].add(jnp.transpose(p["w11"][:, :, 0, 0]))       # + 1x1 at center tap

    # ---- channel-pad to cp on the sides that live in the shared scratch ----
    wf0 = _pad_to(wf0, 2, cp)                       # reads x      (ci -> cp)
    wf1 = _pad_to(_pad_to(wf1, 2, cp), 3, cp)       # x -> h1      (ci, co -> cp)
    wf2 = _pad_to(_pad_to(wf2, 2, cp), 3, cp)       # h1 -> h2     (ci, co -> cp)
    wf3 = _pad_to(wf3, 2, cp)                       # reads h2     (ci -> cp)

    band0 = _band_from_full(wf0, W)                 # (3, W*cp, W*cout)
    band1 = _band_from_full(wf1, W)                 # (3, W*cp, W*cp)
    band2 = _band_from_full(wf2, W)                 # (3, W*cp, W*cp)
    band3 = _band_from_full(wf3, W)                 # (3, W*cp, W*cout)

    # ---- BatchNorm affine params (padded channels get gamma=beta=0 -> stay 0) ----
    gam0 = p["g0"].reshape(1, cout).astype(f32)
    bet0 = p["b0"].reshape(1, cout).astype(f32)
    gam1 = _pad_to(p["g1"].reshape(1, mid).astype(f32), 1, cp)
    bet1 = _pad_to(p["b1"].reshape(1, mid).astype(f32), 1, cp)
    gam2 = _pad_to(p["g2"].reshape(1, cout).astype(f32), 1, cp)
    bet2 = _pad_to(p["b2"].reshape(1, cout).astype(f32), 1, cp)
    gam3 = p["g3"].reshape(1, cout).astype(f32)
    bet3 = p["b3"].reshape(1, cout).astype(f32)

    # ---- 0/1 matrices: reduce over / broadcast to the W-interleaved lane layout ----
    gsum_out = jnp.tile(jnp.eye(cout, dtype=f32), (W, 1))   # (W*cout, cout)
    gbc_out = gsum_out.T                                    # (cout, W*cout)
    gsum_p = jnp.tile(jnp.eye(cp, dtype=f32), (W, 1))       # (W*cp, cp)
    gbc_p = gsum_p.T                                        # (cp, W*cp)

    flops = 2 * 3 * (N * H) * (W * cp) * (2 * W * cp + 2 * W * cout)
    bytes_accessed = 4 * (x_rows.size + band0.size + band1.size + band2.size
                          + band3.size + N * H * W * cout)

    vmem = lambda: pl.BlockSpec(memory_space=pltpu.MemorySpace.VMEM)
    out2d = pl.pallas_call(
        _basicblock_kernel,
        out_shape=jax.ShapeDtypeStruct((N * H, W * cout), jnp.float32),
        in_specs=[vmem() for _ in range(17)],
        out_specs=vmem(),
        scratch_shapes=[
            pltpu.VMEM((N, H + 2, W * cp), jnp.float32),    # reused H-padded buffer
            pltpu.VMEM((N * H, W * cout), jnp.float32),     # shortcut staging
        ],
        compiler_params=pltpu.CompilerParams(vmem_limit_bytes=32 * 1024 * 1024),
        cost_estimate=pl.CostEstimate(flops=flops, transcendentals=0,
                                      bytes_accessed=bytes_accessed),
    )(x_rows, band0, band1, band2, band3,
      gam0, bet0, gam1, bet1, gam2, bet2, gam3, bet3,
      gsum_out, gbc_out, gsum_p, gbc_p)

    return jnp.transpose(out2d.reshape(N, H, W, cout), (0, 3, 1, 2))


# ---------------------- pure-JAX reference (for checking) ----------------------
def _conv_ref(x, w, pad, groups=1):
    return jax.lax.conv_general_dilated(
        x, w, window_strides=(1, 1),
        padding=((pad[0], pad[0]), (pad[1], pad[1])),
        feature_group_count=groups,
        dimension_numbers=("NCHW", "OIHW", "NCHW"))


def _bn_ref(x, g, b, eps=1e-5):
    mean = x.mean(axis=(0, 2, 3), keepdims=True)
    var = ((x - mean) ** 2).mean(axis=(0, 2, 3), keepdims=True)
    return ((x - mean) / jnp.sqrt(var + eps)) * g[None, :, None, None] \
        + b[None, :, None, None]


def basicblock_reference(x, p, cout):
    relu = lambda v: jnp.maximum(v, 0.0)
    identity = _bn_ref(_conv_ref(x, p["w0"], (1, 1)), p["g0"], p["b0"])
    h = relu(_bn_ref(_conv_ref(x, p["w13_1"], (0, 1)) + _conv_ref(x, p["w31_1"], (1, 0)),
                     p["g1"], p["b1"]))
    h = relu(_bn_ref(_conv_ref(h, p["w13_2"], (0, 1)) + _conv_ref(h, p["w31_2"], (1, 0)),
                     p["g2"], p["b2"]))
    h = identity + _bn_ref(_conv_ref(h, p["w11"], (0, 0)) +
                           _conv_ref(h, p["wdw"], (1, 1), groups=cout),
                           p["g3"], p["b3"])
    return relu(h)


def make_params(key, cin, cout, mid):
    ks = jax.random.split(key, 15)
    w = lambda k, s: 0.1 * jax.random.normal(k, s, jnp.float32)
    return dict(
        w0=w(ks[0], (cout, cin, 3, 3)),        # conv0 (shortcut, kernel=3)
        w13_1=w(ks[1], (mid, cin, 1, 3)),      # conv1x3_1
        w31_1=w(ks[2], (mid, cin, 3, 1)),      # conv3x1_1
        w13_2=w(ks[3], (cout, mid, 1, 3)),     # conv1x3_2
        w31_2=w(ks[4], (cout, mid, 3, 1)),     # conv3x1_2
        w11=w(ks[5], (cout, cout, 1, 1)),      # conv1x1
        wdw=w(ks[6], (cout, 1, 3, 3)),         # conv3x3 depthwise (groups=cout)
        g0=1.0 + 0.1 * jax.random.normal(ks[7], (cout,), jnp.float32),
        b0=0.1 * jax.random.normal(ks[8], (cout,), jnp.float32),
        g1=1.0 + 0.1 * jax.random.normal(ks[9], (mid,), jnp.float32),
        b1=0.1 * jax.random.normal(ks[10], (mid,), jnp.float32),
        g2=1.0 + 0.1 * jax.random.normal(ks[11], (cout,), jnp.float32),
        b2=0.1 * jax.random.normal(ks[12], (cout,), jnp.float32),
        g3=1.0 + 0.1 * jax.random.normal(ks[13], (cout,), jnp.float32),
        b3=0.1 * jax.random.normal(ks[14], (cout,), jnp.float32),
    )


if __name__ == "__main__":
    cin, cout, expansion = 4, 8, -1.0
    mid = cout + int((cout - cin) * expansion)   # == cin for expansion=-1
    N, H, W = 2, 16, 16

    key = jax.random.PRNGKey(0)
    kx, kp = jax.random.split(key)
    x = jax.random.normal(kx, (N, cin, H, W), jnp.float32)   # NCHW, PyTorch-style
    params = make_params(kp, cin, cout, mid)

    out = basicblock_forward(x, params, cin, cout, mid)
    out = jax.block_until_ready(out)
    assert out.shape == (N, cout, H, W)

    ref = basicblock_reference(x, params, cout)
    max_diff = float(jnp.max(jnp.abs(out - ref)))
    assert max_diff < 5e-3, f"mismatch vs reference: max|diff|={max_diff}"
    print("KERNEL_OK")
</pallas_src>

<mosaic_0001>
module attributes {stable_mosaic.version = 11 : i64} {
  func.func @_basicblock_kernel(%arg0: memref<2x16x128xf32, #tpu.memory_space<vmem>>, %arg1: memref<3x128x128xf32, #tpu.memory_space<vmem>>, %arg2: memref<3x128x128xf32, #tpu.memory_space<vmem>>, %arg3: memref<3x128x128xf32, #tpu.memory_space<vmem>>, %arg4: memref<3x128x128xf32, #tpu.memory_space<vmem>>, %arg5: memref<1x8xf32, #tpu.memory_space<vmem>>, %arg6: memref<1x8xf32, #tpu.memory_space<vmem>>, %arg7: memref<1x8xf32, #tpu.memory_space<vmem>>, %arg8: memref<1x8xf32, #tpu.memory_space<vmem>>, %arg9: memref<1x8xf32, #tpu.memory_space<vmem>>, %arg10: memref<1x8xf32, #tpu.memory_space<vmem>>, %arg11: memref<1x8xf32, #tpu.memory_space<vmem>>, %arg12: memref<1x8xf32, #tpu.memory_space<vmem>>, %arg13: memref<128x8xf32, #tpu.memory_space<vmem>>, %arg14: memref<8x128xf32, #tpu.memory_space<vmem>>, %arg15: memref<128x8xf32, #tpu.memory_space<vmem>>, %arg16: memref<8x128xf32, #tpu.memory_space<vmem>>, %arg17: memref<32x128xf32, #tpu.memory_space<vmem>>, %arg18: memref<2x18x128xf32, #tpu.memory_space<vmem>>, %arg19: memref<32x128xf32, #tpu.memory_space<vmem>>) attributes {dimension_semantics = [], scalar_prefetch = 0 : i64, scratch_operands = 2 : i64, tpu.core_type = #tpu.core_type<tc>} {
    %cst = arith.constant 0.000000e+00 : f32
    %0 = vector.broadcast %cst : f32 to vector<2x1x128xf32>
    %c0 = arith.constant 0 : index
    %c0_0 = arith.constant 0 : index
    %c0_1 = arith.constant 0 : index
    %1 = vector.load %arg18[%c0, %c0_0, %c0_1] : memref<2x18x128xf32, #tpu.memory_space<vmem>>, vector<2x1x128xf32>
    tpu.vector_store %arg18[%c0, %c0_0, %c0_1], %0 {strides = array<i32>} : memref<2x18x128xf32, #tpu.memory_space<vmem>>, vector<2x1x128xf32>,
    %c0_2 = arith.constant 0 : index
    %c17 = arith.constant 17 : index
    %c0_3 = arith.constant 0 : index
    %2 = vector.load %arg18[%c0_2, %c17, %c0_3] : memref<2x18x128xf32, #tpu.memory_space<vmem>>, vector<2x1x128xf32>
    tpu.vector_store %arg18[%c0_2, %c17, %c0_3], %0 {strides = array<i32>} : memref<2x18x128xf32, #tpu.memory_space<vmem>>, vector<2x1x128xf32>,
    %c0_4 = arith.constant 0 : index
    %c0_5 = arith.constant 0 : index
    %c0_6 = arith.constant 0 : index
    %3 = vector.load %arg0[%c0_4, %c0_5, %c0_6] : memref<2x16x128xf32, #tpu.memory_space<vmem>>, vector<2x16x128xf32>
    %c0_7 = arith.constant 0 : index
    %c1 = arith.constant 1 : index
    %c0_8 = arith.constant 0 : index
    %4 = vector.load %arg18[%c0_7, %c1, %c0_8] : memref<2x18x128xf32, #tpu.memory_space<vmem>>, vector<2x16x128xf32>
    tpu.vector_store %arg18[%c0_7, %c1, %c0_8], %3 {strides = array<i32>} : memref<2x18x128xf32, #tpu.memory_space<vmem>>, vector<2x16x128xf32>,
    %cst_9 = arith.constant 0.000000e+00 : f32
    %5 = vector.broadcast %cst_9 : f32 to vector<32x128xf32>
    %c0_10 = arith.constant 0 : index
    %c0_11 = arith.constant 0 : index
    %c0_12 = arith.constant 0 : index
    %6 = vector.load %arg18[%c0_10, %c0_11, %c0_12] : memref<2x18x128xf32, #tpu.memory_space<vmem>>, vector<2x16x128xf32>
    %7 = vector.shape_cast %6 : vector<2x16x128xf32> to vector<32x128xf32>
    %c0_13 = arith.constant 0 : index
    %c0_14 = arith.constant 0 : index
    %c0_15 = arith.constant 0 : index
    %8 = vector.load %arg1[%c0_13, %c0_14, %c0_15] : memref<3x128x128xf32, #tpu.memory_space<vmem>>, vector<1x128x128xf32>
    %9 = vector.shape_cast %8 : vector<1x128x128xf32> to vector<128x128xf32>
    %cst_16 = arith.constant dense<0.000000e+00> : vector<32x128xf32>
    %10 = tpu.matmul %7, %9, %cst_16 {dimension_numbers = #tpu.dot_dimension_numbers<[1], [0], [0], [1], [0, 0, 1, 1], [], []>} : vector<32x128xf32>, vector<128x128xf32>, vector<32x128xf32> -> vector<32x128xf32>
    %11 = arith.addf %5, %10 : vector<32x128xf32>
    %c0_17 = arith.constant 0 : index
    %c1_18 = arith.constant 1 : index
    %c0_19 = arith.constant 0 : index
    %12 = vector.load %arg18[%c0_17, %c1_18, %c0_19] : memref<2x18x128xf32, #tpu.memory_space<vmem>>, vector<2x16x128xf32>
    %13 = vector.shape_cast %12 : vector<2x16x128xf32> to vector<32x128xf32>
    %c1_20 = arith.constant 1 : index
    %c0_21 = arith.constant 0 : index
    %c0_22 = arith.constant 0 : index
    %14 = vector.load %arg1[%c1_20, %c0_21, %c0_22] : memref<3x128x128xf32, #tpu.memory_space<vmem>>, vector<1x128x128xf32>
    %15 = vector.shape_cast %14 : vector<1x128x128xf32> to vector<128x128xf32>
    %cst_23 = arith.constant dense<0.000000e+00> : vector<32x128xf32>
    %16 = tpu.matmul %13, %15, %cst_23 {dimension_numbers = #tpu.dot_dimension_numbers<[1], [0], [0], [1], [0, 0, 1, 1], [], []>} : vector<32x128xf32>, vector<128x128xf32>, vector<32x128xf32> -> vector<32x128xf32>
    %17 = arith.addf %11, %16 : vector<32x128xf32>
    %c0_24 = arith.constant 0 : index
    %c2 = arith.constant 2 : index
    %c0_25 = arith.constant 0 : index
    %18 = vector.load %arg18[%c0_24, %c2, %c0_25] : memref<2x18x128xf32, #tpu.memory_space<vmem>>, vector<2x16x128xf32>
    %19 = vector.shape_cast %18 : vector<2x16x128xf32> to vector<32x128xf32>
    %c2_26 = arith.constant 2 : index
    %c0_27 = arith.constant 0 : index
    %c0_28 = arith.constant 0 : index
    %20 = vector.load %arg1[%c2_26, %c0_27, %c0_28] : memref<3x128x128xf32, #tpu.memory_space<vmem>>, vector<1x128x128xf32>
    %21 = vector.shape_cast %20 : vector<1x128x128xf32> to vector<128x128xf32>
    %cst_29 = arith.constant dense<0.000000e+00> : vector<32x128xf32>
    %22 = tpu.matmul %19, %21, %cst_29 {dimension_numbers = #tpu.dot_dimension_numbers<[1], [0], [0], [1], [0, 0, 1, 1], [], []>} : vector<32x128xf32>, vector<128x128xf32>, vector<32x128xf32> -> vector<32x128xf32>
    %23 = arith.addf %17, %22 : vector<32x128xf32>
    %cst_30 = arith.constant 0.000000e+00 : f32
    %24 = vector.broadcast %cst_30 : f32 to vector<32x128xf32>
    %c0_31 = arith.constant 0 : index
    %c0_32 = arith.constant 0 : index
    %c0_33 = arith.constant 0 : index
    %25 = vector.load %arg18[%c0_31, %c0_32, %c0_33] : memref<2x18x128xf32, #tpu.memory_space<vmem>>, vector<2x16x128xf32>
    %26 = vector.shape_cast %25 : vector<2x16x128xf32> to vector<32x128xf32>
    %c0_34 = arith.constant 0 : index
    %c0_35 = arith.constant 0 : index
    %c0_36 = arith.constant 0 : index
    %27 = vector.load %arg2[%c0_34, %c0_35, %c0_36] : memref<3x128x128xf32, #tpu.memory_space<vmem>>, vector<1x128x128xf32>
    %28 = vector.shape_cast %27 : vector<1x128x128xf32> to vector<128x128xf32>
    %cst_37 = arith.constant dense<0.000000e+00> : vector<32x128xf32>
    %29 = tpu.matmul %26, %28, %cst_37 {dimension_numbers = #tpu.dot_dimension_numbers<[1], [0], [0], [1], [0, 0, 1, 1], [], []>} : vector<32x128xf32>, vector<128x128xf32>, vector<32x128xf32> -> vector<32x128xf32>
    %30 = arith.addf %24, %29 : vector<32x128xf32>
    %c0_38 = arith.constant 0 : index
    %c1_39 = arith.constant 1 : index
    %c0_40 = arith.constant 0 : index
    %31 = vector.load %arg18[%c0_38, %c1_39, %c0_40] : memref<2x18x128xf32, #tpu.memory_space<vmem>>, vector<2x16x128xf32>
    %32 = vector.shape_cast %31 : vector<2x16x128xf32> to vector<32x128xf32>
    %c1_41 = arith.constant 1 : index
    %c0_42 = arith.constant 0 : index
    %c0_43 = arith.constant 0 : index
    %33 = vector.load %arg2[%c1_41, %c0_42, %c0_43] : memref<3x128x128xf32, #tpu.memory_space<vmem>>, vector<1x128x128xf32>
    %34 = vector.shape_cast %33 : vector<1x128x128xf32> to vector<128x128xf32>
    %cst_44 = arith.constant dense<0.000000e+00> : vector<32x128xf32>
    %35 = tpu.matmul %32, %34, %cst_44 {dimension_numbers = #tpu.dot_dimension_numbers<[1], [0], [0], [1], [0, 0, 1, 1], [], []>} : vector<32x128xf32>, vector<128x128xf32>, vector<32x128xf32> -> vector<32x128xf32>
    %36 = arith.addf %30, %35 : vector<32x128xf32>
    %c0_45 = arith.constant 0 : index
    %c2_46 = arith.constant 2 : index
    %c0_47 = arith.constant 0 : index
    %37 = vector.load %arg18[%c0_45, %c2_46, %c0_47] : memref<2x18x128xf32, #tpu.memory_space<vmem>>, vector<2x16x128xf32>
    %38 = vector.shape_cast %37 : vector<2x16x128xf32> to vector<32x128xf32>
    %c2_48 = arith.constant 2 : index
    %c0_49 = arith.constant 0 : index
    %c0_50 = arith.constant 0 : index
    %39 = vector.load %arg2[%c2_48, %c0_49, %c0_50] : memref<3x128x128xf32, #tpu.memory_space<vmem>>, vector<1x128x128xf32>
    %40 = vector.shape_cast %39 : vector<1x128x128xf32> to vector<128x128xf32>
    %cst_51 = arith.constant dense<0.000000e+00> : vector<32x128xf32>
    %41 = tpu.matmul %38, %40, %cst_51 {dimension_numbers = #tpu.dot_dimension_numbers<[1], [0], [0], [1], [0, 0, 1, 1], [], []>} : vector<32x128xf32>, vector<128x128xf32>, vector<32x128xf32> -> vector<32x128xf32>
    %42 = arith.addf %36, %41 : vector<32x128xf32>
    %cst_52 = arith.constant dense<0.000000e+00> : vector<128xf32>
    %43 = vector.multi_reduction <add>, %23, %cst_52 [0] : vector<32x128xf32> to vector<128xf32>
    %44 = vector.shape_cast %43 : vector<128xf32> to vector<1x128xf32>
    %45 = arith.mulf %23, %23 : vector<32x128xf32>
    %cst_53 = arith.constant dense<0.000000e+00> : vector<128xf32>
    %46 = vector.multi_reduction <add>, %45, %cst_53 [0] : vector<32x128xf32> to vector<128xf32>
    %47 = vector.shape_cast %46 : vector<128xf32> to vector<1x128xf32>
    %c0_54 = arith.constant 0 : index
    %c0_55 = arith.constant 0 : index
    %48 = vector.load %arg13[%c0_54, %c0_55] : memref<128x8xf32, #tpu.memory_space<vmem>>, vector<128x8xf32>
    %cst_56 = arith.constant dense<0.000000e+00> : vector<1x8xf32>
    %49 = tpu.matmul %44, %48, %cst_56 {dimension_numbers = #tpu.dot_dimension_numbers<[1], [0], [0], [1], [0, 0, 1, 1], [], []>} : vector<1x128xf32>, vector<128x8xf32>, vector<1x8xf32> -> vector<1x8xf32>
    %cst_57 = arith.constant 0.001953125 : f32
    %50 = vector.broadcast %cst_57 : f32 to vector<1x8xf32>
    %51 = arith.mulf %49, %50 : vector<1x8xf32>
    %c0_58 = arith.constant 0 : index
    %c0_59 = arith.constant 0 : index
    %52 = vector.load %arg13[%c0_58, %c0_59] : memref<128x8xf32, #tpu.memory_space<vmem>>, vector<128x8xf32>
    %cst_60 = arith.constant dense<0.000000e+00> : vector<1x8xf32>
    %53 = tpu.matmul %47, %52, %cst_60 {dimension_numbers = #tpu.dot_dimension_numbers<[1], [0], [0], [1], [0, 0, 1, 1], [], []>} : vector<1x128xf32>, vector<128x8xf32>, vector<1x8xf32> -> vector<1x8xf32>
    %cst_61 = arith.constant 0.001953125 : f32
    %54 = vector.broadcast %cst_61 : f32 to vector<1x8xf32>
    %55 = arith.mulf %53, %54 : vector<1x8xf32>
    %56 = arith.mulf %51, %51 : vector<1x8xf32>
    %57 = arith.subf %55, %56 : vector<1x8xf32>
    %c0_62 = arith.constant 0 : index
    %c0_63 = arith.constant 0 : index
    %58 = vector.load %arg5[%c0_62, %c0_63] : memref<1x8xf32, #tpu.memory_space<vmem>>, vector<1x8xf32>
    %cst_64 = arith.constant 9.99999974E-6 : f32
    %59 = vector.broadcast %cst_64 : f32 to vector<1x8xf32>
    %60 = arith.addf %57, %59 : vector<1x8xf32>
    %61 = math.rsqrt %60 : vector<1x8xf32>
    %62 = arith.mulf %58, %61 : vector<1x8xf32>
    %c0_65 = arith.constant 0 : index
    %c0_66 = arith.constant 0 : index
    %63 = vector.load %arg6[%c0_65, %c0_66] : memref<1x8xf32, #tpu.memory_space<vmem>>, vector<1x8xf32>
    %64 = arith.mulf %51, %62 : vector<1x8xf32>
    %65 = arith.subf %63, %64 : vector<1x8xf32>
    %c0_67 = arith.constant 0 : index
    %c0_68 = arith.constant 0 : index
    %66 = vector.load %arg14[%c0_67, %c0_68] : memref<8x128xf32, #tpu.memory_space<vmem>>, vector<8x128xf32>
    %cst_69 = arith.constant dense<0.000000e+00> : vector<1x128xf32>
    %67 = tpu.matmul %62, %66, %cst_69 {dimension_numbers = #tpu.dot_dimension_numbers<[1], [0], [0], [1], [0, 0, 1, 1], [], []>} : vector<1x8xf32>, vector<8x128xf32>, vector<1x128xf32> -> vector<1x128xf32>
    %c0_70 = arith.constant 0 : index
    %c0_71 = arith.constant 0 : index
    %68 = vector.load %arg14[%c0_70, %c0_71] : memref<8x128xf32, #tpu.memory_space<vmem>>, vector<8x128xf32>
    %cst_72 = arith.constant dense<0.000000e+00> : vector<1x128xf32>
    %69 = tpu.matmul %65, %68, %cst_72 {dimension_numbers = #tpu.dot_dimension_numbers<[1], [0], [0], [1], [0, 0, 1, 1], [], []>} : vector<1x8xf32>, vector<8x128xf32>, vector<1x128xf32> -> vector<1x128xf32>
    %70 = vector.broadcast %67 : vector<1x128xf32> to vector<32x128xf32>
    %71 = arith.mulf %23, %70 : vector<32x128xf32>
    %72 = vector.broadcast %69 : vector<1x128xf32> to vector<32x128xf32>
    %73 = arith.addf %71, %72 : vector<32x128xf32>
    %c0_73 = arith.constant 0 : index
    %c0_74 = arith.constant 0 : index
    %74 = vector.load %arg19[%c0_73, %c0_74] : memref<32x128xf32, #tpu.memory_space<vmem>>, vector<32x128xf32>
    tpu.vector_store %arg19[%c0_73, %c0_74], %73 {strides = array<i32>} : memref<32x128xf32, #tpu.memory_space<vmem>>, vector<32x128xf32>,
    %cst_75 = arith.constant dense<0.000000e+00> : vector<128xf32>
    %75 = vector.multi_reduction <add>, %42, %cst_75 [0] : vector<32x128xf32> to vector<128xf32>
    %76 = vector.shape_cast %75 : vector<128xf32> to vector<1x128xf32>
    %77 = arith.mulf %42, %42 : vector<32x128xf32>
    %cst_76 = arith.constant dense<0.000000e+00> : vector<128xf32>
    %78 = vector.multi_reduction <add>, %77, %cst_76 [0] : vector<32x128xf32> to vector<128xf32>
    %79 = vector.shape_cast %78 : vector<128xf32> to vector<1x128xf32>
    %c0_77 = arith.constant 0 : index
    %c0_78 = arith.constant 0 : index
    %80 = vector.load %arg15[%c0_77, %c0_78] : memref<128x8xf32, #tpu.memory_space<vmem>>, vector<128x8xf32>
    %cst_79 = arith.constant dense<0.000000e+00> : vector<1x8xf32>
    %81 = tpu.matmul %76, %80, %cst_79 {dimension_numbers = #tpu.dot_dimension_numbers<[1], [0], [0], [1], [0, 0, 1, 1], [], []>} : vector<1x128xf32>, vector<128x8xf32>, vector<1x8xf32> -> vector<1x8xf32>
    %cst_80 = arith.constant 0.001953125 : f32
    %82 = vector.broadcast %cst_80 : f32 to vector<1x8xf32>
    %83 = arith.mulf %81, %82 : vector<1x8xf32>
    %c0_81 = arith.constant 0 : index
    %c0_82 = arith.constant 0 : index
    %84 = vector.load %arg15[%c0_81, %c0_82] : memref<128x8xf32, #tpu.memory_space<vmem>>, vector<128x8xf32>
    %cst_83 = arith.constant dense<0.000000e+00> : vector<1x8xf32>
    %85 = tpu.matmul %79, %84, %cst_83 {dimension_numbers = #tpu.dot_dimension_numbers<[1], [0], [0], [1], [0, 0, 1, 1], [], []>} : vector<1x128xf32>, vector<128x8xf32>, vector<1x8xf32> -> vector<1x8xf32>
    %cst_84 = arith.constant 0.001953125 : f32
    %86 = vector.broadcast %cst_84 : f32 to vector<1x8xf32>
    %87 = arith.mulf %85, %86 : vector<1x8xf32>
    %88 = arith.mulf %83, %83 : vector<1x8xf32>
    %89 = arith.subf %87, %88 : vector<1x8xf32>
    %c0_85 = arith.constant 0 : index
    %c0_86 = arith.constant 0 : index
    %90 = vector.load %arg7[%c0_85, %c0_86] : memref<1x8xf32, #tpu.memory_space<vmem>>, vector<1x8xf32>
    %cst_87 = arith.constant 9.99999974E-6 : f32
    %91 = vector.broadcast %cst_87 : f32 to vector<1x8xf32>
    %92 = arith.addf %89, %91 : vector<1x8xf32>
    %93 = math.rsqrt %92 : vector<1x8xf32>
    %94 = arith.mulf %90, %93 : vector<1x8xf32>
    %c0_88 = arith.constant 0 : index
    %c0_89 = arith.constant 0 : index
    %95 = vector.load %arg8[%c0_88, %c0_89] : memref<1x8xf32, #tpu.memory_space<vmem>>, vector<1x8xf32>
    %96 = arith.mulf %83, %94 : vector<1x8xf32>
    %97 = arith.subf %95, %96 : vector<1x8xf32>
    %c0_90 = arith.constant 0 : index
    %c0_91 = arith.constant 0 : index
    %98 = vector.load %arg16[%c0_90, %c0_91] : memref<8x128xf32, #tpu.memory_space<vmem>>, vector<8x128xf32>
    %cst_92 = arith.constant dense<0.000000e+00> : vector<1x128xf32>
    %99 = tpu.matmul %94, %98, %cst_92 {dimension_numbers = #tpu.dot_dimension_numbers<[1], [0], [0], [1], [0, 0, 1, 1], [], []>} : vector<1x8xf32>, vector<8x128xf32>, vector<1x128xf32> -> vector<1x128xf32>
    %c0_93 = arith.constant 0 : index
    %c0_94 = arith.constant 0 : index
    %100 = vector.load %arg16[%c0_93, %c0_94] : memref<8x128xf32, #tpu.memory_space<vmem>>, vector<8x128xf32>
    %cst_95 = arith.constant dense<0.000000e+00> : vector<1x128xf32>
    %101 = tpu.matmul %97, %100, %cst_95 {dimension_numbers = #tpu.dot_dimension_numbers<[1], [0], [0], [1], [0, 0, 1, 1], [], []>} : vector<1x8xf32>, vector<8x128xf32>, vector<1x128xf32> -> vector<1x128xf32>
    %102 = vector.broadcast %99 : vector<1x128xf32> to vector<32x128xf32>
    %103 = arith.mulf %42, %102 : vector<32x128xf32>
    %104 = vector.broadcast %101 : vector<1x128xf32> to vector<32x128xf32>
    %105 = arith.addf %103, %104 : vector<32x128xf32>
    %cst_96 = arith.constant 0.000000e+00 : f32
    %106 = vector.broadcast %cst_96 : f32 to vector<32x128xf32>
    %107 = arith.maximumf %105, %106 : vector<32x128xf32>
    %108 = vector.shape_cast %107 : vector<32x128xf32> to vector<2x16x128xf32>
    %c0_97 = arith.constant 0 : index
    %c1_98 = arith.constant 1 : index
    %c0_99 = arith.constant 0 : index
    %109 = vector.load %arg18[%c0_97, %c1_98, %c0_99] : memref<2x18x128xf32, #tpu.memory_space<vmem>>, vector<2x16x128xf32>
    tpu.vector_store %arg18[%c0_97, %c1_98, %c0_99], %108 {strides = array<i32>} : memref<2x18x128xf32, #tpu.memory_space<vmem>>, vector<2x16x128xf32>,
    %cst_100 = arith.constant 0.000000e+00 : f32
    %110 = vector.broadcast %cst_100 : f32 to vector<32x128xf32>
    %c0_101 = arith.constant 0 : index
    %c0_102 = arith.constant 0 : index
    %c0_103 = arith.constant 0 : index
    %111 = vector.load %arg18[%c0_101, %c0_102, %c0_103] : memref<2x18x128xf32, #tpu.memory_space<vmem>>, vector<2x16x128xf32>
    %112 = vector.shape_cast %111 : vector<2x16x128xf32> to vector<32x128xf32>
    %c0_104 = arith.constant 0 : index
    %c0_105 = arith.constant 0 : index
    %c0_106 = arith.constant 0 : index
    %113 = vector.load %arg3[%c0_104, %c0_105, %c0_106] : memref<3x128x128xf32, #tpu.memory_space<vmem>>, vector<1x128x128xf32>
    %114 = vector.shape_cast %113 : vector<1x128x128xf32> to vector<128x128xf32>
    %cst_107 = arith.constant dense<0.000000e+00> : vector<32x128xf32>
    %115 = tpu.matmul %112, %114, %cst_107 {dimension_numbers = #tpu.dot_dimension_numbers<[1], [0], [0], [1], [0, 0, 1, 1], [], []>} : vector<32x128xf32>, vector<128x128xf32>, vector<32x128xf32> -> vector<32x128xf32>
    %116 = arith.addf %110, %115 : vector<32x128xf32>
    %c0_108 = arith.constant 0 : index
    %c1_109 = arith.constant 1 : index
    %c0_110 = arith.constant 0 : index
    %117 = vector.load %arg18[%c0_108, %c1_109, %c0_110] : memref<2x18x128xf32, #tpu.memory_space<vmem>>, vector<2x16x128xf32>
    %118 = vector.shape_cast %117 : vector<2x16x128xf32> to vector<32x128xf32>
    %c1_111 = arith.constant 1 : index
    %c0_112 = arith.constant 0 : index
    %c0_113 = arith.constant 0 : index
    %119 = vector.load %arg3[%c1_111, %c0_112, %c0_113] : memref<3x128x128xf32, #tpu.memory_space<vmem>>, vector<1x128x128xf32>
    %120 = vector.shape_cast %119 : vector<1x128x128xf32> to vector<128x128xf32>
    %cst_114 = arith.constant dense<0.000000e+00> : vector<32x128xf32>
    %121 = tpu.matmul %118, %120, %cst_114 {dimension_numbers = #tpu.dot_dimension_numbers<[1], [0], [0], [1], [0, 0, 1, 1], [], []>} : vector<32x128xf32>, vector<128x128xf32>, vector<32x128xf32> -> vector<32x128xf32>
    %122 = arith.addf %116, %121 : vector<32x128xf32>
    %c0_115 = arith.constant 0 : index
    %c2_116 = arith.constant 2 : index
    %c0_117 = arith.constant 0 : index
    %123 = vector.load %arg18[%c0_115, %c2_116, %c0_117] : memref<2x18x128xf32, #tpu.memory_space<vmem>>, vector<2x16x128xf32>
    %124 = vector.shape_cast %123 : vector<2x16x128xf32> to vector<32x128xf32>
    %c2_118 = arith.constant 2 : index
    %c0_119 = arith.constant 0 : index
    %c0_120 = arith.constant 0 : index
    %125 = vector.load %arg3[%c2_118, %c0_119, %c0_120] : memref<3x128x128xf32, #tpu.memory_space<vmem>>, vector<1x128x128xf32>
    %126 = vector.shape_cast %125 : vector<1x128x128xf32> to vector<128x128xf32>
    %cst_121 = arith.constant dense<0.000000e+00> : vector<32x128xf32>
    %127 = tpu.matmul %124, %126, %cst_121 {dimension_numbers = #tpu.dot_dimension_numbers<[1], [0], [0], [1], [0, 0, 1, 1], [], []>} : vector<32x128xf32>, vector<128x128xf32>, vector<32x128xf32> -> vector<32x128xf32>
    %128 = arith.addf %122, %127 : vector<32x128xf32>
    %cst_122 = arith.constant dense<0.000000e+00> : vector<128xf32>
    %129 = vector.multi_reduction <add>, %128, %cst_122 [0] : vector<32x128xf32> to vector<128xf32>
    %130 = vector.shape_cast %129 : vector<128xf32> to vector<1x128xf32>
    %131 = arith.mulf %128, %128 : vector<32x128xf32>
    %cst_123 = arith.constant dense<0.000000e+00> : vector<128xf32>
    %132 = vector.multi_reduction <add>, %131, %cst_123 [0] : vector<32x128xf32> to vector<128xf32>
    %133 = vector.shape_cast %132 : vector<128xf32> to vector<1x128xf32>
    %c0_124 = arith.constant 0 : index
    %c0_125 = arith.constant 0 : index
    %134 = vector.load %arg15[%c0_124, %c0_125] : memref<128x8xf32, #tpu.memory_space<vmem>>, vector<128x8xf32>
    %cst_126 = arith.constant dense<0.000000e+00> : vector<1x8xf32>
    %135 = tpu.matmul %130, %134, %cst_126 {dimension_numbers = #tpu.dot_dimension_numbers<[1], [0], [0], [1], [0, 0, 1, 1], [], []>} : vector<1x128xf32>, vector<128x8xf32>, vector<1x8xf32> -> vector<1x8xf32>
    %cst_127 = arith.constant 0.001953125 : f32
    %136 = vector.broadcast %cst_127 : f32 to vector<1x8xf32>
    %137 = arith.mulf %135, %136 : vector<1x8xf32>
    %c0_128 = arith.constant 0 : index
    %c0_129 = arith.constant 0 : index
    %138 = vector.load %arg15[%c0_128, %c0_129] : memref<128x8xf32, #tpu.memory_space<vmem>>, vector<128x8xf32>
    %cst_130 = arith.constant dense<0.000000e+00> : vector<1x8xf32>
    %139 = tpu.matmul %133, %138, %cst_130 {dimension_numbers = #tpu.dot_dimension_numbers<[1], [0], [0], [1], [0, 0, 1, 1], [], []>} : vector<1x128xf32>, vector<128x8xf32>, vector<1x8xf32> -> vector<1x8xf32>
    %cst_131 = arith.constant 0.001953125 : f32
    %140 = vector.broadcast %cst_131 : f32 to vector<1x8xf32>
    %141 = arith.mulf %139, %140 : vector<1x8xf32>
    %142 = arith.mulf %137, %137 : vector<1x8xf32>
    %143 = arith.subf %141, %142 : vector<1x8xf32>
    %c0_132 = arith.constant 0 : index
    %c0_133 = arith.constant 0 : index
    %144 = vector.load %arg9[%c0_132, %c0_133] : memref<1x8xf32, #tpu.memory_space<vmem>>, vector<1x8xf32>
    %cst_134 = arith.constant 9.99999974E-6 : f32
    %145 = vector.broadcast %cst_134 : f32 to vector<1x8xf32>
    %146 = arith.addf %143, %145 : vector<1x8xf32>
    %147 = math.rsqrt %146 : vector<1x8xf32>
    %148 = arith.mulf %144, %147 : vector<1x8xf32>
    %c0_135 = arith.constant 0 : index
    %c0_136 = arith.constant 0 : index
    %149 = vector.load %arg10[%c0_135, %c0_136] : memref<1x8xf32, #tpu.memory_space<vmem>>, vector<1x8xf32>
    %150 = arith.mulf %137, %148 : vector<1x8xf32>
    %151 = arith.subf %149, %150 : vector<1x8xf32>
    %c0_137 = arith.constant 0 : index
    %c0_138 = arith.constant 0 : index
    %152 = vector.load %arg16[%c0_137, %c0_138] : memref<8x128xf32, #tpu.memory_space<vmem>>, vector<8x128xf32>
    %cst_139 = arith.constant dense<0.000000e+00> : vector<1x128xf32>
    %153 = tpu.matmul %148, %152, %cst_139 {dimension_numbers = #tpu.dot_dimension_numbers<[1], [0], [0], [1], [0, 0, 1, 1], [], []>} : vector<1x8xf32>, vector<8x128xf32>, vector<1x128xf32> -> vector<1x128xf32>
    %c0_140 = arith.constant 0 : index
    %c0_141 = arith.constant 0 : index
    %154 = vector.load %arg16[%c0_140, %c0_141] : memref<8x128xf32, #tpu.memory_space<vmem>>, vector<8x128xf32>
    %cst_142 = arith.constant dense<0.000000e+00> : vector<1x128xf32>
    %155 = tpu.matmul %151, %154, %cst_142 {dimension_numbers = #tpu.dot_dimension_numbers<[1], [0], [0], [1], [0, 0, 1, 1], [], []>} : vector<1x8xf32>, vector<8x128xf32>, vector<1x128xf32> -> vector<1x128xf32>
    %156 = vector.broadcast %153 : vector<1x128xf32> to vector<32x128xf32>
    %157 = arith.mulf %128, %156 : vector<32x128xf32>
    %158 = vector.broadcast %155 : vector<1x128xf32> to vector<32x128xf32>
    %159 = arith.addf %157, %158 : vector<32x128xf32>
    %cst_143 = arith.constant 0.000000e+00 : f32
    %160 = vector.broadcast %cst_143 : f32 to vector<32x128xf32>
    %161 = arith.maximumf %159, %160 : vector<32x128xf32>
    %162 = vector.shape_cast %161 : vector<32x128xf32> to vector<2x16x128xf32>
    %c0_144 = arith.constant 0 : index
    %c1_145 = arith.constant 1 : index
    %c0_146 = arith.constant 0 : index
    %163 = vector.load %arg18[%c0_144, %c1_145, %c0_146] : memref<2x18x128xf32, #tpu.memory_space<vmem>>, vector<2x16x128xf32>
    tpu.vector_store %arg18[%c0_144, %c1_145, %c0_146], %162 {strides = array<i32>} : memref<2x18x128xf32, #tpu.memory_space<vmem>>, vector<2x16x128xf32>,
    %cst_147 = arith.constant 0.000000e+00 : f32
    %164 = vector.broadcast %cst_147 : f32 to vector<32x128xf32>
    %c0_148 = arith.constant 0 : index
    %c0_149 = arith.constant 0 : index
    %c0_150 = arith.constant 0 : index
    %165 = vector.load %arg18[%c0_148, %c0_149, %c0_150] : memref<2x18x128xf32, #tpu.memory_space<vmem>>, vector<2x16x128xf32>
    %166 = vector.shape_cast %165 : vector<2x16x128xf32> to vector<32x128xf32>
    %c0_151 = arith.constant 0 : index
    %c0_152 = arith.constant 0 : index
    %c0_153 = arith.constant 0 : index
    %167 = vector.load %arg4[%c0_151, %c0_152, %c0_153] : memref<3x128x128xf32, #tpu.memory_space<vmem>>, vector<1x128x128xf32>
    %168 = vector.shape_cast %167 : vector<1x128x128xf32> to vector<128x128xf32>
    %cst_154 = arith.constant dense<0.000000e+00> : vector<32x128xf32>
    %169 = tpu.matmul %166, %168, %cst_154 {dimension_numbers = #tpu.dot_dimension_numbers<[1], [0], [0], [1], [0, 0, 1, 1], [], []>} : vector<32x128xf32>, vector<128x128xf32>, vector<32x128xf32> -> vector<32x128xf32>
    %170 = arith.addf %164, %169 : vector<32x128xf32>
    %c0_155 = arith.constant 0 : index
    %c1_156 = arith.constant 1 : index
    %c0_157 = arith.constant 0 : index
    %171 = vector.load %arg18[%c0_155, %c1_156, %c0_157] : memref<2x18x128xf32, #tpu.memory_space<vmem>>, vector<2x16x128xf32>
    %172 = vector.shape_cast %171 : vector<2x16x128xf32> to vector<32x128xf32>
    %c1_158 = arith.constant 1 : index
    %c0_159 = arith.constant 0 : index
    %c0_160 = arith.constant 0 : index
    %173 = vector.load %arg4[%c1_158, %c0_159, %c0_160] : memref<3x128x128xf32, #tpu.memory_space<vmem>>, vector<1x128x128xf32>
    %174 = vector.shape_cast %173 : vector<1x128x128xf32> to vector<128x128xf32>
    %cst_161 = arith.constant dense<0.000000e+00> : vector<32x128xf32>
    %175 = tpu.matmul %172, %174, %cst_161 {dimension_numbers = #tpu.dot_dimension_numbers<[1], [0], [0], [1], [0, 0, 1, 1], [], []>} : vector<32x128xf32>, vector<128x128xf32>, vector<32x128xf32> -> vector<32x128xf32>
    %176 = arith.addf %170, %175 : vector<32x128xf32>
    %c0_162 = arith.constant 0 : index
    %c2_163 = arith.constant 2 : index
    %c0_164 = arith.constant 0 : index
    %177 = vector.load %arg18[%c0_162, %c2_163, %c0_164] : memref<2x18x128xf32, #tpu.memory_space<vmem>>, vector<2x16x128xf32>
    %178 = vector.shape_cast %177 : vector<2x16x128xf32> to vector<32x128xf32>
    %c2_165 = arith.constant 2 : index
    %c0_166 = arith.constant 0 : index
    %c0_167 = arith.constant 0 : index
    %179 = vector.load %arg4[%c2_165, %c0_166, %c0_167] : memref<3x128x128xf32, #tpu.memory_space<vmem>>, vector<1x128x128xf32>
    %180 = vector.shape_cast %179 : vector<1x128x128xf32> to vector<128x128xf32>
    %cst_168 = arith.constant dense<0.000000e+00> : vector<32x128xf32>
    %181 = tpu.matmul %178, %180, %cst_168 {dimension_numbers = #tpu.dot_dimension_numbers<[1], [0], [0], [1], [0, 0, 1, 1], [], []>} : vector<32x128xf32>, vector<128x128xf32>, vector<32x128xf32> -> vector<32x128xf32>
    %182 = arith.addf %176, %181 : vector<32x128xf32>
    %c0_169 = arith.constant 0 : index
    %c0_170 = arith.constant 0 : index
    %183 = vector.load %arg19[%c0_169, %c0_170] : memref<32x128xf32, #tpu.memory_space<vmem>>, vector<32x128xf32>
    %cst_171 = arith.constant dense<0.000000e+00> : vector<128xf32>
    %184 = vector.multi_reduction <add>, %182, %cst_171 [0] : vector<32x128xf32> to vector<128xf32>
    %185 = vector.shape_cast %184 : vector<128xf32> to vector<1x128xf32>
    %186 = arith.mulf %182, %182 : vector<32x128xf32>
    %cst_172 = arith.constant dense<0.000000e+00> : vector<128xf32>
    %187 = vector.multi_reduction <add>, %186, %cst_172 [0] : vector<32x128xf32> to vector<128xf32>
    %188 = vector.shape_cast %187 : vector<128xf32> to vector<1x128xf32>
    %c0_173 = arith.constant 0 : index
    %c0_174 = arith.constant 0 : index
    %189 = vector.load %arg13[%c0_173, %c0_174] : memref<128x8xf32, #tpu.memory_space<vmem>>, vector<128x8xf32>
    %cst_175 = arith.constant dense<0.000000e+00> : vector<1x8xf32>
    %190 = tpu.matmul %185, %189, %cst_175 {dimension_numbers = #tpu.dot_dimension_numbers<[1], [0], [0], [1], [0, 0, 1, 1], [], []>} : vector<1x128xf32>, vector<128x8xf32>, vector<1x8xf32> -> vector<1x8xf32>
    %cst_176 = arith.constant 0.001953125 : f32
    %191 = vector.broadcast %cst_176 : f32 to vector<1x8xf32>
    %192 = arith.mulf %190, %191 : vector<1x8xf32>
    %c0_177 = arith.constant 0 : index
    %c0_178 = arith.constant 0 : index
    %193 = vector.load %arg13[%c0_177, %c0_178] : memref<128x8xf32, #tpu.memory_space<vmem>>, vector<128x8xf32>
    %cst_179 = arith.constant dense<0.000000e+00> : vector<1x8xf32>
    %194 = tpu.matmul %188, %193, %cst_179 {dimension_numbers = #tpu.dot_dimension_numbers<[1], [0], [0], [1], [0, 0, 1, 1], [], []>} : vector<1x128xf32>, vector<128x8xf32>, vector<1x8xf32> -> vector<1x8xf32>
    %cst_180 = arith.constant 0.001953125 : f32
    %195 = vector.broadcast %cst_180 : f32 to vector<1x8xf32>
    %196 = arith.mulf %194, %195 : vector<1x8xf32>
    %197 = arith.mulf %192, %192 : vector<1x8xf32>
    %198 = arith.subf %196, %197 : vector<1x8xf32>
    %c0_181 = arith.constant 0 : index
    %c0_182 = arith.constant 0 : index
    %199 = vector.load %arg11[%c0_181, %c0_182] : memref<1x8xf32, #tpu.memory_space<vmem>>, vector<1x8xf32>
    %cst_183 = arith.constant 9.99999974E-6 : f32
    %200 = vector.broadcast %cst_183 : f32 to vector<1x8xf32>
    %201 = arith.addf %198, %200 : vector<1x8xf32>
    %202 = math.rsqrt %201 : vector<1x8xf32>
    %203 = arith.mulf %199, %202 : vector<1x8xf32>
    %c0_184 = arith.constant 0 : index
    %c0_185 = arith.constant 0 : index
    %204 = vector.load %arg12[%c0_184, %c0_185] : memref<1x8xf32, #tpu.memory_space<vmem>>, vector<1x8xf32>
    %205 = arith.mulf %192, %203 : vector<1x8xf32>
    %206 = arith.subf %204, %205 : vector<1x8xf32>
    %c0_186 = arith.constant 0 : index
    %c0_187 = arith.constant 0 : index
    %207 = vector.load %arg14[%c0_186, %c0_187] : memref<8x128xf32, #tpu.memory_space<vmem>>, vector<8x128xf32>
    %cst_188 = arith.constant dense<0.000000e+00> : vector<1x128xf32>
    %208 = tpu.matmul %203, %207, %cst_188 {dimension_numbers = #tpu.dot_dimension_numbers<[1], [0], [0], [1], [0, 0, 1, 1], [], []>} : vector<1x8xf32>, vector<8x128xf32>, vector<1x128xf32> -> vector<1x128xf32>
    %c0_189 = arith.constant 0 : index
    %c0_190 = arith.constant 0 : index
    %209 = vector.load %arg14[%c0_189, %c0_190] : memref<8x128xf32, #tpu.memory_space<vmem>>, vector<8x128xf32>
    %cst_191 = arith.constant dense<0.000000e+00> : vector<1x128xf32>
    %210 = tpu.matmul %206, %209, %cst_191 {dimension_numbers = #tpu.dot_dimension_numbers<[1], [0], [0], [1], [0, 0, 1, 1], [], []>} : vector<1x8xf32>, vector<8x128xf32>, vector<1x128xf32> -> vector<1x128xf32>
    %211 = vector.broadcast %208 : vector<1x128xf32> to vector<32x128xf32>
    %212 = arith.mulf %182, %211 : vector<32x128xf32>
    %213 = vector.broadcast %210 : vector<1x128xf32> to vector<32x128xf32>
    %214 = arith.addf %212, %213 : vector<32x128xf32>
    %215 = arith.addf %183, %214 : vector<32x128xf32>
    %cst_192 = arith.constant 0.000000e+00 : f32
    %216 = vector.broadcast %cst_192 : f32 to vector<32x128xf32>
    %217 = arith.maximumf %215, %216 : vector<32x128xf32>
    %c0_193 = arith.constant 0 : index
    %c0_194 = arith.constant 0 : index
    %218 = vector.load %arg17[%c0_193, %c0_194] : memref<32x128xf32, #tpu.memory_space<vmem>>, vector<32x128xf32>
    tpu.vector_store %arg17[%c0_193, %c0_194], %217 {strides = array<i32>} : memref<32x128xf32, #tpu.memory_space<vmem>>, vector<32x128xf32>,
    return
  }
}

</mosaic_0001>

<llo_original>
// kernel: tpu_custom_call.1
$region0: #{tpu_custom_call.1}
  #allocation0 [shape = 'u32[]', space=smem, size = 0x4, offset = 0x4, fixed_abs, tag = 'smem constant byte address 0x4 - core index']
  #allocation1 [shape = 'u32[72,128]{1,0:T(1,128)}', space=vmem, size = 0x9000, scoped, tag = 'internal scratch']
  #allocation2 [shape = 'f32[2,18,128]{2,1,0:T(8,128)}', space=vmem, size = 0x6000, scoped, tag = 'scratch operand']
  #allocation3 [shape = 'f32[32,128]{1,0:T(8,128)}', space=vmem, size = 0x4000, scoped, tag = 'scratch operand']
  %s0 = inlined_call_operand.vmem [shape: f32[2,16,128], index: 0, kind: input, shape index: {}]
  %s1 = inlined_call_operand.hbm [shape: f32[3,128,128], index: 1, kind: input, shape index: {}]
  %s2 = inlined_call_operand.hbm [shape: f32[3,128,128], index: 2, kind: input, shape index: {}]
  %s3 = inlined_call_operand.hbm [shape: f32[3,128,128], index: 3, kind: input, shape index: {}]
  %s4 = inlined_call_operand.hbm [shape: f32[3,128,128], index: 4, kind: input, shape index: {}]
  %s5 = inlined_call_operand.vmem [shape: f32[1,8], index: 5, kind: input, shape index: {}]
  %s6 = inlined_call_operand.vmem [shape: f32[1,8], index: 6, kind: input, shape index: {}]
  %s7 = inlined_call_operand.vmem [shape: f32[1,8], index: 7, kind: input, shape index: {}]
  %s8 = inlined_call_operand.vmem [shape: f32[1,8], index: 8, kind: input, shape index: {}]
  %s9 = inlined_call_operand.vmem [shape: f32[1,8], index: 9, kind: input, shape index: {}]
  %s10 = inlined_call_operand.vmem [shape: f32[1,8], index: 10, kind: input, shape index: {}]
  %s11 = inlined_call_operand.vmem [shape: f32[1,8], index: 11, kind: input, shape index: {}]
  %s12 = inlined_call_operand.vmem [shape: f32[1,8], index: 12, kind: input, shape index: {}]
  %s13 = inlined_call_operand.vmem [shape: f32[128,8], index: 13, kind: input, shape index: {}]
  %s14 = inlined_call_operand.vmem [shape: f32[8,128], index: 14, kind: input, shape index: {}]
  %s15 = inlined_call_operand.vmem [shape: f32[128,8], index: 15, kind: input, shape index: {}]
  %s16 = inlined_call_operand.vmem [shape: f32[8,128], index: 16, kind: input, shape index: {}]
  %s17 = inlined_call_operand.hbm [shape: f32[32,128], index: 17, kind: output, shape index: {}]
  %s18 = sld [smem:[#allocation0]]
  $region94: #{tpu_custom_call.1} parent=0
    _
  %s20 = ssub.s32 1, %s18
  %s21 = scalar_select 0, %s20, %s18
  $region1: #{tpu_custom_call.1} parent=0
    #allocation4 [shape = 'u8[196608]{0}', space=vmem, size = 0x30000, scoped, tag = 'input window, operand 1, single buffered']
    #allocation5 [shape = 's32[1]{0}', space=sflag, size = 0x4, scoped, tag = 'scoped memory for tpu_custom_call.1']
    #allocation6 [shape = 's32[1]{0}', space=sflag, size = 0x4, scoped, tag = 'scoped memory for tpu_custom_call.1']
    #allocation7 [shape = 'u8[196608]{0}', space=vmem, size = 0x30000, scoped, tag = 'input window, operand 2, single buffered']
    #allocation8 [shape = 's32[1]{0}', space=sflag, size = 0x4, scoped, tag = 'scoped memory for tpu_custom_call.1']
    #allocation9 [shape = 'u8[196608]{0}', space=vmem, size = 0x30000, scoped, tag = 'input window, operand 3, single buffered']
    #allocation10 [shape = 'u8[196608]{0}', space=vmem, size = 0x30000, scoped, tag = 'input window, operand 4, single buffered']
    #allocation11 [shape = 's32[1]{0}', space=sflag, size = 0x4, scoped, tag = 'scoped memory for tpu_custom_call.1']
    #allocation12 [shape = 'u8[16384]{0}', space=vmem, size = 0x4000, scoped, tag = 'output window, operand 0, single buffered']
    %22 = vsyncpa [#allocation5], 0
    %23 = vsyncpa [#allocation8], 0
    %24 = vsyncpa [#allocation11], 0
    %25 = vsyncpa [#allocation6], 0
    // Predicated region
    $region2: #{tpu_custom_call.1} parent=1 // pred_check
      _
    $region3: #{tpu_custom_call.1} parent=1 // pred_check_branch
      %27 = sbr.rel (0) target = $region5
    $region4: #{tpu_custom_call.1} parent=1 // pred_region
      _
    $region5: #{tpu_custom_call.1} parent=1 // pred_fallthru
      _
    // Predicated region
    $region6: #{tpu_custom_call.1} parent=1 // pred_check
      _
    $region7: #{tpu_custom_call.1} parent=1 // pred_check_branch
      %29 = sbr.rel (0) target = $region9
    $region8: #{tpu_custom_call.1} parent=1 // pred_region
      %31 = vsyncadd [#allocation5], 0
      %s32 = sshll.u32 %s1, 4
      %s33 = int_to_ptr.hbm [resolvable:$true] %s32
      %s34 = sshll.u32 [#allocation4], 4
      %s35 = int_to_ptr.vmem [resolvable:$true] %s34
      %40 = dma.hbm_to_vmem [thread:$0]  %s33, 6144, %s35, [#allocation5], 128, 128, 8
    $region9: #{tpu_custom_call.1} parent=1 // pred_fallthru
      _
    // Predicated region
    $region10: #{tpu_custom_call.1} parent=1 // pred_check
      _
    $region11: #{tpu_custom_call.1} parent=1 // pred_check_branch
      %42 = sbr.rel (0) target = $region13
    $region12: #{tpu_custom_call.1} parent=1 // pred_region
      %44 = vsyncadd [#allocation8], 0
      %s45 = sshll.u32 %s2, 4
      %s46 = int_to_ptr.hbm [resolvable:$true] %s45
      %s47 = sshll.u32 [#allocation7], 4
      %s48 = int_to_ptr.vmem [resolvable:$true] %s47
      %53 = dma.hbm_to_vmem [thread:$0]  %s46, 6144, %s48, [#allocation8], 128, 128, 8
    $region13: #{tpu_custom_call.1} parent=1 // pred_fallthru
      _
    // Predicated region
    $region14: #{tpu_custom_call.1} parent=1 // pred_check
      _
    $region15: #{tpu_custom_call.1} parent=1 // pred_check_branch
      %55 = sbr.rel (0) target = $region17
    $region16: #{tpu_custom_call.1} parent=1 // pred_region
      %57 = vsyncadd [#allocation8], 0
      %s58 = sshll.u32 %s3, 4
      %s59 = int_to_ptr.hbm [resolvable:$true] %s58
      %s60 = sshll.u32 [#allocation9], 4
      %s61 = int_to_ptr.vmem [resolvable:$true] %s60
      %66 = dma.hbm_to_vmem [thread:$0]  %s59, 6144, %s61, [#allocation8], 128, 128, 8
    $region17: #{tpu_custom_call.1} parent=1 // pred_fallthru
      _
    // Predicated region
    $region18: #{tpu_custom_call.1} parent=1 // pred_check
      _
    $region19: #{tpu_custom_call.1} parent=1 // pred_check_branch
      %68 = sbr.rel (0) target = $region21
    $region20: #{tpu_custom_call.1} parent=1 // pred_region
      %70 = vsyncadd [#allocation11], 0
      %s71 = sshll.u32 %s4, 4
      %s72 = int_to_ptr.hbm [resolvable:$true] %s71
      %s73 = sshll.u32 [#allocation10], 4
      %s74 = int_to_ptr.vmem [resolvable:$true] %s73
      %79 = dma.hbm_to_vmem [thread:$0]  %s72, 6144, %s74, [#allocation11], 128, 128, 8
    $region21: #{tpu_custom_call.1} parent=1 // pred_fallthru
      _
    // Predicated region
    $region22: #{tpu_custom_call.1} parent=1 // pred_check
      _
    $region23: #{tpu_custom_call.1} parent=1 // pred_check_branch
      %81 = sbr.rel (0) target = $region25
    $region24: #{tpu_custom_call.1} parent=1 // pred_region
      _
    $region25: #{tpu_custom_call.1} parent=1 // pred_fallthru
      _
    // Predicated region
    $region26: #{tpu_custom_call.1} parent=1 // pred_check
      _
    $region27: #{tpu_custom_call.1} parent=1 // pred_check_branch
      %83 = sbr.rel (0) target = $region29
    $region28: #{tpu_custom_call.1} parent=1 // pred_region
      _
    $region29: #{tpu_custom_call.1} parent=1 // pred_fallthru
      _
    // Predicated region
    $region30: #{tpu_custom_call.1} parent=1 // pred_check
      _
    $region31: #{tpu_custom_call.1} parent=1 // pred_check_branch
      %85 = sbr.rel (0) target = $region33
    $region32: #{tpu_custom_call.1} parent=1 // pred_region
      _
    $region33: #{tpu_custom_call.1} parent=1 // pred_fallthru
      _
    // Predicated region
    $region34: #{tpu_custom_call.1} parent=1 // pred_check
      _
    $region35: #{tpu_custom_call.1} parent=1 // pred_check_branch
      %87 = sbr.rel (0) target = $region37
    $region36: #{tpu_custom_call.1} parent=1 // pred_region
      _
    $region37: #{tpu_custom_call.1} parent=1 // pred_fallthru
      _
    // Predicated region
    $region38: #{tpu_custom_call.1} parent=1 // pred_check
      _
    $region39: #{tpu_custom_call.1} parent=1 // pred_check_branch
      %89 = sbr.rel (0) target = $region41
    $region40: #{tpu_custom_call.1} parent=1 // pred_region
      _
    $region41: #{tpu_custom_call.1} parent=1 // pred_fallthru
      _
    // Predicated region
    $region42: #{tpu_custom_call.1} parent=1 // pred_check
      _
    $region43: #{tpu_custom_call.1} parent=1 // pred_check_branch
      %91 = sbr.rel (0) target = $region45
    $region44: #{tpu_custom_call.1} parent=1 // pred_region
      _
    $region45: #{tpu_custom_call.1} parent=1 // pred_fallthru
      _
    // Predicated region
    $region46: #{tpu_custom_call.1} parent=1 // pred_check
      _
    $region47: #{tpu_custom_call.1} parent=1 // pred_check_branch
      %93 = sbr.rel (0) target = $region49
    $region48: #{tpu_custom_call.1} parent=1 // pred_region
      _
    $region49: #{tpu_custom_call.1} parent=1 // pred_fallthru
      _
    // Predicated region
    $region50: #{tpu_custom_call.1} parent=1 // pred_check
      _
    $region51: #{tpu_custom_call.1} parent=1 // pred_check_branch
      %95 = sbr.rel (0) target = $region53
    $region52: #{tpu_custom_call.1} parent=1 // pred_region
      _
    $region53: #{tpu_custom_call.1} parent=1 // pred_fallthru
      _
    // Predicated region
    $region54: #{tpu_custom_call.1} parent=1 // pred_check
      _
    $region55: #{tpu_custom_call.1} parent=1 // pred_check_branch
      %97 = sbr.rel (0) target = $region57
    $region56: #{tpu_custom_call.1} parent=1 // pred_region
      _
    $region57: #{tpu_custom_call.1} parent=1 // pred_fallthru
      _
    // Predicated region
    $region58: #{tpu_custom_call.1} parent=1 // pred_check
      _
    $region59: #{tpu_custom_call.1} parent=1 // pred_check_branch
      %99 = sbr.rel (0) target = $region61
    $region60: #{tpu_custom_call.1} parent=1 // pred_region
      _
    $region61: #{tpu_custom_call.1} parent=1 // pred_fallthru
      _
    // Predicated region
    $region62: #{tpu_custom_call.1} parent=1 // pred_check
      _
    $region63: #{tpu_custom_call.1} parent=1 // pred_check_branch
      %101 = sbr.rel (0) target = $region65
    $region64: #{tpu_custom_call.1} parent=1 // pred_region
      _
    $region65: #{tpu_custom_call.1} parent=1 // pred_fallthru
      _
    // Predicated region
    $region66: #{tpu_custom_call.1} parent=1 // pred_check
      _
    $region67: #{tpu_custom_call.1} parent=1 // pred_check_branch
      %103 = sbr.rel (0) target = $region69
    $region68: #{tpu_custom_call.1} parent=1 // pred_region
      _
    $region69: #{tpu_custom_call.1} parent=1 // pred_fallthru
      _
    // Predicated region
    $region70: #{tpu_custom_call.1} parent=1 // pred_check
      _
    $region71: #{tpu_custom_call.1} parent=1 // pred_check_branch
      %105 = sbr.rel (0) target = $region73
    $region72: #{tpu_custom_call.1} parent=1 // pred_region
      %107 = dma.done [#allocation5], 6144
    $region73: #{tpu_custom_call.1} parent=1 // pred_fallthru
      _
    // Predicated region
    $region74: #{tpu_custom_call.1} parent=1 // pred_check
      _
    $region75: #{tpu_custom_call.1} parent=1 // pred_check_branch
      %109 = sbr.rel (0) target = $region77
    $region76: #{tpu_custom_call.1} parent=1 // pred_region
      %111 = dma.done [#allocation8], 6144
    $region77: #{tpu_custom_call.1} parent=1 // pred_fallthru
      _
    // Predicated region
    $region78: #{tpu_custom_call.1} parent=1 // pred_check
      _
    $region79: #{tpu_custom_call.1} parent=1 // pred_check_branch
      %113 = sbr.rel (0) target = $region81
    $region80: #{tpu_custom_call.1} parent=1 // pred_region
      %115 = dma.done [#allocation8], 6144
    $region81: #{tpu_custom_call.1} parent=1 // pred_fallthru
      _
    // Predicated region
    $region82: #{tpu_custom_call.1} parent=1 // pred_check
      _
    $region83: #{tpu_custom_call.1} parent=1 // pred_check_branch
      %117 = sbr.rel (0) target = $region85
    $region84: #{tpu_custom_call.1} parent=1 // pred_region
      %119 = dma.done [#allocation11], 6144
    $region85: #{tpu_custom_call.1} parent=1 // pred_fallthru
      _
    %120 = vst [vmem:[#allocation2] sm:$0x1] 0.0
    %121 = vst [vmem:[#allocation2 + $0x18] sm:$0x1] 0.0
    %122 = vst [vmem:[#allocation2 + $0x11] sm:$0x1] 0.0
    %123 = vst [vmem:[#allocation2 + $0x29] sm:$0x1] 0.0
    %v124 = vld [vmem:[%s0] sm:$0xff]
    %v125 = vld [vmem:[%s0 + $0x8] sm:$0xff]
    %v126 = vld [vmem:[%s0 + $0x10] sm:$0xff]
    %v127 = vld [vmem:[%s0 + $0x18] sm:$0xff]
    %128 = vst [vmem:[#allocation2 + $0x1] sm:$0xff] %v124
    %129 = vst [vmem:[#allocation2 + $0x9] sm:$0xff] %v125
    %130 = vst [vmem:[#allocation2 + $0x19] sm:$0xff] %v126
    %131 = vst [vmem:[#allocation2 + $0x21] sm:$0xff] %v127
    %v132 = vld [vmem:[#allocation2] sm:$0xff]
    %v133 = vld [vmem:[#allocation2 + $0x8] sm:$0xff]
    %v134 = vld [vmem:[#allocation2 + $0x18] sm:$0xff]
    %v135 = vld [vmem:[#allocation2 + $0x20] sm:$0xff]
    %v136 = vld [vmem:[#allocation4] sm:$0xff]
    %v137 = vld [vmem:[#allocation4 + $0x8] sm:$0xff]
    %v138 = vld [vmem:[#allocation4 + $0x10] sm:$0xff]
    %v139 = vld [vmem:[#allocation4 + $0x18] sm:$0xff]
    %v140 = vld [vmem:[#allocation4 + $0x20] sm:$0xff]
    %v141 = vld [vmem:[#allocation4 + $0x28] sm:$0xff]
    %v142 = vld [vmem:[#allocation4 + $0x30] sm:$0xff]
    %v143 = vld [vmem:[#allocation4 + $0x38] sm:$0xff]
    %v144 = vld [vmem:[#allocation4 + $0x40] sm:$0xff]
    %v145 = vld [vmem:[#allocation4 + $0x48] sm:$0xff]
    %v146 = vld [vmem:[#allocation4 + $0x50] sm:$0xff]
    %v147 = vld [vmem:[#allocation4 + $0x58] sm:$0xff]
    %v148 = vld [vmem:[#allocation4 + $0x60] sm:$0xff]
    %v149 = vld [vmem:[#allocation4 + $0x68] sm:$0xff]
    %v150 = vld [vmem:[#allocation4 + $0x70] sm:$0xff]
    %v151 = vld [vmem:[#allocation4 + $0x78] sm:$0xff]
    %v152 = vld [vmem:[#allocation2 + $0x1] sm:$0xff]
    %v153 = vld [vmem:[#allocation2 + $0x9] sm:$0xff]
    %v154 = vld [vmem:[#allocation2 + $0x19] sm:$0xff]
    %v155 = vld [vmem:[#allocation2 + $0x21] sm:$0xff]
    %s156 = scalar_lea.vmem [#allocation4], 128
    %v157 = vld [vmem:[%s156] sm:$0xff]
    %v158 = vld [vmem:[%s156 + $0x8] sm:$0xff]
    %v159 = vld [vmem:[%s156 + $0x10] sm:$0xff]
    %v160 = vld [vmem:[%s156 + $0x18] sm:$0xff]
    %v161 = vld [vmem:[%s156 + $0x20] sm:$0xff]
    %v162 = vld [vmem:[%s156 + $0x28] sm:$0xff]
    %v163 = vld [vmem:[%s156 + $0x30] sm:$0xff]
    %v164 = vld [vmem:[%s156 + $0x38] sm:$0xff]
    %v165 = vld [vmem:[%s156 + $0x40] sm:$0xff]
    %v166 = vld [vmem:[%s156 + $0x48] sm:$0xff]
    %v167 = vld [vmem:[%s156 + $0x50] sm:$0xff]
    %v168 = vld [vmem:[%s156 + $0x58] sm:$0xff]
    %v169 = vld [vmem:[%s156 + $0x60] sm:$0xff]
    %v170 = vld [vmem:[%s156 + $0x68] sm:$0xff]
    %v171 = vld [vmem:[%s156 + $0x70] sm:$0xff]
    %v172 = vld [vmem:[%s156 + $0x78] sm:$0xff]
    %173 = vmatpush.msra.mxu0 %v172
    %174 = vmatpush.msra.mxu0 %v171
    %175 = vmatpush.msra.mxu0 %v170
    %176 = vmatpush.msra.mxu0 %v169
    %177 = vmatpush.msra.mxu0 %v168
    %178 = vmatpush.msra.mxu0 %v167
    %179 = vmatpush.msra.mxu0 %v166
    %180 = vmatpush.msra.mxu0 %v165
    %181 = vmatpush.msra.mxu0 %v164
    %182 = vmatpush.msra.mxu0 %v163
    %183 = vmatpush.msra.mxu0 %v162
    %184 = vmatpush.msra.mxu0 %v161
    %185 = vmatpush.msra.mxu0 %v160
    %186 = vmatpush.msra.mxu0 %v159
    %187 = vmatpush.msra.mxu0 %v158
    %188 = vmatpush.msra.mxu0 %v157
    %189 = vmatmul.f32.gmra.mxu0 %v152
    %v190 = vpop.f32.mrf.mxu0
    %v191 = vadd.f32 0.0, %v190
    %192 = vmatmul.f32.gmra.mxu0 %v153
    %v193 = vpop.f32.mrf.mxu0
    %v194 = vadd.f32 0.0, %v193
    %195 = vmatmul.f32.gmra.mxu0 %v154
    %v196 = vpop.f32.mrf.mxu0
    %v197 = vadd.f32 0.0, %v196
    %198 = vmatmul.f32.gmra.mxu0 %v155
    %v199 = vpop.f32.mrf.mxu0
    %v200 = vadd.f32 0.0, %v199
    %201 = vdwg.mxu0
    %202 = vmatpush.msra.mxu0 %v151
    %203 = vmatpush.msra.mxu0 %v150
    %204 = vmatpush.msra.mxu0 %v149
    %205 = vmatpush.msra.mxu0 %v148
    %206 = vmatpush.msra.mxu0 %v147
    %207 = vmatpush.msra.mxu0 %v146
    %208 = vmatpush.msra.mxu0 %v145
    %209 = vmatpush.msra.mxu0 %v144
    %210 = vmatpush.msra.mxu0 %v143
    %211 = vmatpush.msra.mxu0 %v142
    %212 = vmatpush.msra.mxu0 %v141
    %213 = vmatpush.msra.mxu0 %v140
    %214 = vmatpush.msra.mxu0 %v139
    %215 = vmatpush.msra.mxu0 %v138
    %216 = vmatpush.msra.mxu0 %v137
    %217 = vmatpush.msra.mxu0 %v136
    %218 = vmatmul.f32.gmra.mxu0 %v132
    %v219 = vpop.f32.mrf.mxu0
    %v220 = vadd.f32 %v191, %v219
    %221 = vmatmul.f32.gmra.mxu0 %v133
    %v222 = vpop.f32.mrf.mxu0
    %v223 = vadd.f32 %v194, %v222
    %224 = vmatmul.f32.gmra.mxu0 %v134
    %v225 = vpop.f32.mrf.mxu0
    %v226 = vadd.f32 %v197, %v225
    %227 = vmatmul.f32.gmra.mxu0 %v135
    %v228 = vpop.f32.mrf.mxu0
    %v229 = vadd.f32 %v200, %v228
    %230 = vdwg.mxu0
    %v231 = vld [vmem:[#allocation2 + $0x2] sm:$0xff]
    %v232 = vld [vmem:[#allocation2 + $0xa] sm:$0xff]
    %v233 = vld [vmem:[#allocation2 + $0x1a] sm:$0xff]
    %v234 = vld [vmem:[#allocation2 + $0x22] sm:$0xff]
    %s235 = scalar_lea.vmem [#allocation4], 256
    %v236 = vld [vmem:[%s235] sm:$0xff]
    %v237 = vld [vmem:[%s235 + $0x8] sm:$0xff]
    %v238 = vld [vmem:[%s235 + $0x10] sm:$0xff]
    %v239 = vld [vmem:[%s235 + $0x18] sm:$0xff]
    %v240 = vld [vmem:[%s235 + $0x20] sm:$0xff]
    %v241 = vld [vmem:[%s235 + $0x28] sm:$0xff]
    %v242 = vld [vmem:[%s235 + $0x30] sm:$0xff]
    %v243 = vld [vmem:[%s235 + $0x38] sm:$0xff]
    %v244 = vld [vmem:[%s235 + $0x40] sm:$0xff]
    %v245 = vld [vmem:[%s235 + $0x48] sm:$0xff]
    %v246 = vld [vmem:[%s235 + $0x50] sm:$0xff]
    %v247 = vld [vmem:[%s235 + $0x58] sm:$0xff]
    %v248 = vld [vmem:[%s235 + $0x60] sm:$0xff]
    %v249 = vld [vmem:[%s235 + $0x68] sm:$0xff]
    %v250 = vld [vmem:[%s235 + $0x70] sm:$0xff]
    %v251 = vld [vmem:[%s235 + $0x78] sm:$0xff]
    %252 = vmatpush.msra.mxu0 %v251
    %253 = vmatpush.msra.mxu0 %v250
    %254 = vmatpush.msra.mxu0 %v249
    %255 = vmatpush.msra.mxu0 %v248
    %256 = vmatpush.msra.mxu0 %v247
    %257 = vmatpush.msra.mxu0 %v246
    %258 = vmatpush.msra.mxu0 %v245
    %259 = vmatpush.msra.mxu0 %v244
    %260 = vmatpush.msra.mxu0 %v243
    %261 = vmatpush.msra.mxu0 %v242
    %262 = vmatpush.msra.mxu0 %v241
    %263 = vmatpush.msra.mxu0 %v240
    %264 = vmatpush.msra.mxu0 %v239
    %265 = vmatpush.msra.mxu0 %v238
    %266 = vmatpush.msra.mxu0 %v237
    %267 = vmatpush.msra.mxu0 %v236
    %268 = vmatmul.f32.gmra.mxu0 %v231
    %v269 = vpop.f32.mrf.mxu0
    %v270 = vadd.f32 0.0, %v269
    %271 = vmatmul.f32.gmra.mxu0 %v232
    %v272 = vpop.f32.mrf.mxu0
    %v273 = vadd.f32 0.0, %v272
    %274 = vmatmul.f32.gmra.mxu0 %v233
    %v275 = vpop.f32.mrf.mxu0
    %v276 = vadd.f32 0.0, %v275
    %277 = vmatmul.f32.gmra.mxu0 %v234
    %v278 = vpop.f32.mrf.mxu0
    %v279 = vadd.f32 0.0, %v278
    %280 = vdwg.mxu0
    %v281 = vadd.f32 %v220, %v270
    %v282 = vadd.f32 %v223, %v273
    %v283 = vadd.f32 %v226, %v276
    %v284 = vadd.f32 %v229, %v279
    %v285 = vld [vmem:[#allocation7] sm:$0xff]
    %v286 = vld [vmem:[#allocation7 + $0x8] sm:$0xff]
    %v287 = vld [vmem:[#allocation7 + $0x10] sm:$0xff]
    %v288 = vld [vmem:[#allocation7 + $0x18] sm:$0xff]
    %v289 = vld [vmem:[#allocation7 + $0x20] sm:$0xff]
    %v290 = vld [vmem:[#allocation7 + $0x28] sm:$0xff]
    %v291 = vld [vmem:[#allocation7 + $0x30] sm:$0xff]
    %v292 = vld [vmem:[#allocation7 + $0x38] sm:$0xff]
    %v293 = vld [vmem:[#allocation7 + $0x40] sm:$0xff]
    %v294 = vld [vmem:[#allocation7 + $0x48] sm:$0xff]
    %v295 = vld [vmem:[#allocation7 + $0x50] sm:$0xff]
    %v296 = vld [vmem:[#allocation7 + $0x58] sm:$0xff]
    %v297 = vld [vmem:[#allocation7 + $0x60] sm:$0xff]
    %v298 = vld [vmem:[#allocation7 + $0x68] sm:$0xff]
    %v299 = vld [vmem:[#allocation7 + $0x70] sm:$0xff]
    %v300 = vld [vmem:[#allocation7 + $0x78] sm:$0xff]
    %s301 = scalar_lea.vmem [#allocation7], 128
    %v302 = vld [vmem:[%s301] sm:$0xff]
    %v303 = vld [vmem:[%s301 + $0x8] sm:$0xff]
    %v304 = vld [vmem:[%s301 + $0x10] sm:$0xff]
    %v305 = vld [vmem:[%s301 + $0x18] sm:$0xff]
    %v306 = vld [vmem:[%s301 + $0x20] sm:$0xff]
    %v307 = vld [vmem:[%s301 + $0x28] sm:$0xff]
    %v308 = vld [vmem:[%s301 + $0x30] sm:$0xff]
    %v309 = vld [vmem:[%s301 + $0x38] sm:$0xff]
    %v310 = vld [vmem:[%s301 + $0x40] sm:$0xff]
    %v311 = vld [vmem:[%s301 + $0x48] sm:$0xff]
    %v312 = vld [vmem:[%s301 + $0x50] sm:$0xff]
    %v313 = vld [vmem:[%s301 + $0x58] sm:$0xff]
    %v314 = vld [vmem:[%s301 + $0x60] sm:$0xff]
    %v315 = vld [vmem:[%s301 + $0x68] sm:$0xff]
    %v316 = vld [vmem:[%s301 + $0x70] sm:$0xff]
    %v317 = vld [vmem:[%s301 + $0x78] sm:$0xff]
    %318 = vmatpush.msra.mxu0 %v317
    %319 = vmatpush.msra.mxu0 %v316
    %320 = vmatpush.msra.mxu0 %v315
    %321 = vmatpush.msra.mxu0 %v314
    %322 = vmatpush.msra.mxu0 %v313
    %323 = vmatpush.msra.mxu0 %v312
    %324 = vmatpush.msra.mxu0 %v311
    %325 = vmatpush.msra.mxu0 %v310
    %326 = vmatpush.msra.mxu0 %v309
    %327 = vmatpush.msra.mxu0 %v308
    %328 = vmatpush.msra.mxu0 %v307
    %329 = vmatpush.msra.mxu0 %v306
    %330 = vmatpush.msra.mxu0 %v305
    %331 = vmatpush.msra.mxu0 %v304
    %332 = vmatpush.msra.mxu0 %v303
    %333 = vmatpush.msra.mxu0 %v302
    %334 = vmatmul.f32.gmra.mxu0 %v152
    %v335 = vpop.f32.mrf.mxu0
    %v336 = vadd.f32 0.0, %v335
    %337 = vmatmul.f32.gmra.mxu0 %v153
    %v338 = vpop.f32.mrf.mxu0
    %v339 = vadd.f32 0.0, %v338
    %340 = vmatmul.f32.gmra.mxu0 %v154
    %v341 = vpop.f32.mrf.mxu0
    %v342 = vadd.f32 0.0, %v341
    %343 = vmatmul.f32.gmra.mxu0 %v155
    %v344 = vpop.f32.mrf.mxu0
    %v345 = vadd.f32 0.0, %v344
    %346 = vdwg.mxu0
    %347 = vmatpush.msra.mxu0 %v300
    %348 = vmatpush.msra.mxu0 %v299
    %349 = vmatpush.msra.mxu0 %v298
    %350 = vmatpush.msra.mxu0 %v297
    %351 = vmatpush.msra.mxu0 %v296
    %352 = vmatpush.msra.mxu0 %v295
    %353 = vmatpush.msra.mxu0 %v294
    %354 = vmatpush.msra.mxu0 %v293
    %355 = vmatpush.msra.mxu0 %v292
    %356 = vmatpush.msra.mxu0 %v291
    %357 = vmatpush.msra.mxu0 %v290
    %358 = vmatpush.msra.mxu0 %v289
    %359 = vmatpush.msra.mxu0 %v288
    %360 = vmatpush.msra.mxu0 %v287
    %361 = vmatpush.msra.mxu0 %v286
    %362 = vmatpush.msra.mxu0 %v285
    %363 = vmatmul.f32.gmra.mxu0 %v132
    %v364 = vpop.f32.mrf.mxu0
    %v365 = vadd.f32 %v336, %v364
    %366 = vmatmul.f32.gmra.mxu0 %v133
    %v367 = vpop.f32.mrf.mxu0
    %v368 = vadd.f32 %v339, %v367
    %369 = vmatmul.f32.gmra.mxu0 %v134
    %v370 = vpop.f32.mrf.mxu0
    %v371 = vadd.f32 %v342, %v370
    %372 = vmatmul.f32.gmra.mxu0 %v135
    %v373 = vpop.f32.mrf.mxu0
    %v374 = vadd.f32 %v345, %v373
    %375 = vdwg.mxu0
    %s376 = scalar_lea.vmem [#allocation7], 256
    %v377 = vld [vmem:[%s376] sm:$0xff]
    %v378 = vld [vmem:[%s376 + $0x8] sm:$0xff]
    %v379 = vld [vmem:[%s376 + $0x10] sm:$0xff]
    %v380 = vld [vmem:[%s376 + $0x18] sm:$0xff]
    %v381 = vld [vmem:[%s376 + $0x20] sm:$0xff]
    %v382 = vld [vmem:[%s376 + $0x28] sm:$0xff]
    %v383 = vld [vmem:[%s376 + $0x30] sm:$0xff]
    %v384 = vld [vmem:[%s376 + $0x38] sm:$0xff]
    %v385 = vld [vmem:[%s376 + $0x40] sm:$0xff]
    %v386 = vld [vmem:[%s376 + $0x48] sm:$0xff]
    %v387 = vld [vmem:[%s376 + $0x50] sm:$0xff]
    %v388 = vld [vmem:[%s376 + $0x58] sm:$0xff]
    %v389 = vld [vmem:[%s376 + $0x60] sm:$0xff]
    %v390 = vld [vmem:[%s376 + $0x68] sm:$0xff]
    %v391 = vld [vmem:[%s376 + $0x70] sm:$0xff]
    %v392 = vld [vmem:[%s376 + $0x78] sm:$0xff]
    %393 = vmatpush.msra.mxu0 %v392
    %394 = vmatpush.msra.mxu0 %v391
    %395 = vmatpush.msra.mxu0 %v390
    %396 = vmatpush.msra.mxu0 %v389
    %397 = vmatpush.msra.mxu0 %v388
    %398 = vmatpush.msra.mxu0 %v387
    %399 = vmatpush.msra.mxu0 %v386
    %400 = vmatpush.msra.mxu0 %v385
    %401 = vmatpush.msra.mxu0 %v384
    %402 = vmatpush.msra.mxu0 %v383
    %403 = vmatpush.msra.mxu0 %v382
    %404 = vmatpush.msra.mxu0 %v381
    %405 = vmatpush.msra.mxu0 %v380
    %406 = vmatpush.msra.mxu0 %v379
    %407 = vmatpush.msra.mxu0 %v378
    %408 = vmatpush.msra.mxu0 %v377
    %409 = vmatmul.f32.gmra.mxu0 %v231
    %v410 = vpop.f32.mrf.mxu0
    %v411 = vadd.f32 0.0, %v410
    %412 = vmatmul.f32.gmra.mxu0 %v232
    %v413 = vpop.f32.mrf.mxu0
    %v414 = vadd.f32 0.0, %v413
    %415 = vmatmul.f32.gmra.mxu0 %v233
    %v416 = vpop.f32.mrf.mxu0
    %v417 = vadd.f32 0.0, %v416
    %418 = vmatmul.f32.gmra.mxu0 %v234
    %v419 = vpop.f32.mrf.mxu0
    %v420 = vadd.f32 0.0, %v419
    %421 = vdwg.mxu0
    %v422 = vadd.f32 %v365, %v411
    %v423 = vadd.f32 %v368, %v414
    %v424 = vadd.f32 %v371, %v417
    %v425 = vadd.f32 %v374, %v420
    %v426 = vadd.f32 %v281, %v282
    %v427 = vadd.f32 %v426, %v283
    %v428 = vadd.f32 %v427, %v284
    %v429 = vrot.slane %v428, 4
    %v430 = vadd.f32 %v428, %v429
    %v431 = vrot.slane %v430, 2
    %v432 = vadd.f32 %v430, %v431
    %v433 = vrot.slane %v432, 1
    %v434 = vadd.f32 %v432, %v433
    %v435 = vmul.f32 %v281, %v281
    %v436 = vmul.f32 %v282, %v282
    %v437 = vmul.f32 %v283, %v283
    %v438 = vmul.f32 %v284, %v284
    %v439 = vadd.f32 %v435, %v436
    %v440 = vadd.f32 %v439, %v437
    %v441 = vadd.f32 %v440, %v438
    %v442 = vrot.slane %v441, 4
    %v443 = vadd.f32 %v441, %v442
    %v444 = vrot.slane %v443, 2
    %v445 = vadd.f32 %v443, %v444
    %v446 = vrot.slane %v445, 1
    %v447 = vadd.f32 %v445, %v446
    %v448 = vld [vmem:[%s13] sm:$0xff]
    %v449 = vld [vmem:[%s13 + $0x8] sm:$0xff]
    %v450 = vld [vmem:[%s13 + $0x10] sm:$0xff]
    %v451 = vld [vmem:[%s13 + $0x18] sm:$0xff]
    %v452 = vld [vmem:[%s13 + $0x20] sm:$0xff]
    %v453 = vld [vmem:[%s13 + $0x28] sm:$0xff]
    %v454 = vld [vmem:[%s13 + $0x30] sm:$0xff]
    %v455 = vld [vmem:[%s13 + $0x38] sm:$0xff]
    %v456 = vld [vmem:[%s13 + $0x40] sm:$0xff]
    %v457 = vld [vmem:[%s13 + $0x48] sm:$0xff]
    %v458 = vld [vmem:[%s13 + $0x50] sm:$0xff]
    %v459 = vld [vmem:[%s13 + $0x58] sm:$0xff]
    %v460 = vld [vmem:[%s13 + $0x60] sm:$0xff]
    %v461 = vld [vmem:[%s13 + $0x68] sm:$0xff]
    %v462 = vld [vmem:[%s13 + $0x70] sm:$0xff]
    %v463 = vld [vmem:[%s13 + $0x78] sm:$0xff]
    %464 = vmatpush.msra.mxu0 %v463
    %465 = vmatpush.msra.mxu0 %v462
    %466 = vmatpush.msra.mxu0 %v461
    %467 = vmatpush.msra.mxu0 %v460
    %468 = vmatpush.msra.mxu0 %v459
    %469 = vmatpush.msra.mxu0 %v458
    %470 = vmatpush.msra.mxu0 %v457
    %471 = vmatpush.msra.mxu0 %v456
    %472 = vmatpush.msra.mxu0 %v455
    %473 = vmatpush.msra.mxu0 %v454
    %474 = vmatpush.msra.mxu0 %v453
    %475 = vmatpush.msra.mxu0 %v452
    %476 = vmatpush.msra.mxu0 %v451
    %477 = vmatpush.msra.mxu0 %v450
    %478 = vmatpush.msra.mxu0 %v449
    %479 = vmatpush.msra.mxu0 %v448
    %480 = vmatmul.f32.gmra.mxu0 %v434
    %v481 = vpop.f32.mrf.mxu0
    %v482 = vadd.f32 0.0, %v481
    %483 = vdwg.mxu0
    %v484 = vmul.f32 %v482, 0.001953125
    %485 = vmatpush.msra.mxu0 %v463
    %486 = vmatpush.msra.mxu0 %v462
    %487 = vmatpush.msra.mxu0 %v461
    %488 = vmatpush.msra.mxu0 %v460
    %489 = vmatpush.msra.mxu0 %v459
    %490 = vmatpush.msra.mxu0 %v458
    %491 = vmatpush.msra.mxu0 %v457
    %492 = vmatpush.msra.mxu0 %v456
    %493 = vmatpush.msra.mxu0 %v455
    %494 = vmatpush.msra.mxu0 %v454
    %495 = vmatpush.msra.mxu0 %v453
    %496 = vmatpush.msra.mxu0 %v452
    %497 = vmatpush.msra.mxu0 %v451
    %498 = vmatpush.msra.mxu0 %v450
    %499 = vmatpush.msra.mxu0 %v449
    %500 = vmatpush.msra.mxu0 %v448
    %501 = vmatmul.f32.gmra.mxu0 %v447
    %v502 = vpop.f32.mrf.mxu0
    %v503 = vadd.f32 0.0, %v502
    %504 = vdwg.mxu0
    %v505 = vmul.f32 %v503, 0.001953125
    %v506 = vmul.f32 %v484, %v484
    %v507 = vsub.f32 %v505, %v506
    %v508 = vld [vmem:[%s5] sm:$0x1]
    %v509 = vadd.f32 %v507, 1e-05
    %v510 = vrsqrt.pop %v509
    %v511 = vmul.f32 %v510, %v509
    %v512 = vmul.f32 %v511, %v510
    %v513 = vmul.f32 0.5, %v512
    %v514 = vsub.f32 1.5, %v513
    %v515 = vmul.f32 %v510, %v514
    %vm516 = vweird.f32 %v509
    %vm517 = vweird.f32 %v510
    %vm518 = vmor %vm516, %vm517
    %v519 = vsel %vm518, %v510, %v515
    %v520 = vmul.f32 %v508, %v519
    %v521 = vld [vmem:[%s6] sm:$0x1]
    %v522 = vmul.f32 %v484, %v520
    %v523 = vsub.f32 %v521, %v522
    %v524 = vld [vmem:[%s14] sm:$0xff]
    %vm525 = vcmask 64512
    %v527 = vsel %vm525, %v520, 0
    %529 = vmatpush.msra.mxu0 0.0
    %530 = vmatpush.msra.mxu0 0.0
    %531 = vmatpush.msra.mxu0 0.0
    %532 = vmatpush.msra.mxu0 0.0
    %533 = vmatpush.msra.mxu0 0.0
    %534 = vmatpush.msra.mxu0 0.0
    %535 = vmatpush.msra.mxu0 0.0
    %536 = vmatpush.msra.mxu0 0.0
    %537 = vmatpush.msra.mxu0 0.0
    %538 = vmatpush.msra.mxu0 0.0
    %539 = vmatpush.msra.mxu0 0.0
    %540 = vmatpush.msra.mxu0 0.0
    %541 = vmatpush.msra.mxu0 0.0
    %542 = vmatpush.msra.mxu0 0.0
    %543 = vmatpush.msra.mxu0 0.0
    %544 = vmatpush.msra.mxu0 %v524
    %545 = vmatmul.f32.gmra.mxu0 %v527
    %v546 = vpop.f32.mrf.mxu0
    %v547 = vadd.f32 0.0, %v546
    %548 = vdwg.mxu0
    %v550 = vsel %vm525, %v523, 0
    %552 = vmatpush.msra.mxu0 0.0
    %553 = vmatpush.msra.mxu0 0.0
    %554 = vmatpush.msra.mxu0 0.0
    %555 = vmatpush.msra.mxu0 0.0
    %556 = vmatpush.msra.mxu0 0.0
    %557 = vmatpush.msra.mxu0 0.0
    %558 = vmatpush.msra.mxu0 0.0
    %559 = vmatpush.msra.mxu0 0.0
    %560 = vmatpush.msra.mxu0 0.0
    %561 = vmatpush.msra.mxu0 0.0
    %562 = vmatpush.msra.mxu0 0.0
    %563 = vmatpush.msra.mxu0 0.0
    %564 = vmatpush.msra.mxu0 0.0
    %565 = vmatpush.msra.mxu0 0.0
    %566 = vmatpush.msra.mxu0 0.0
    %567 = vmatpush.msra.mxu0 %v524
    %568 = vmatmul.f32.gmra.mxu0 %v550
    %v569 = vpop.f32.mrf.mxu0
    %v570 = vadd.f32 0.0, %v569
    %571 = vdwg.mxu0
    %v572 = vperm.slane %v547, 0
    %v573 = vmul.f32 %v281, %v572
    %v574 = vmul.f32 %v282, %v572
    %v575 = vmul.f32 %v283, %v572
    %v576 = vmul.f32 %v284, %v572
    %v577 = vperm.slane %v570, 0
    %v578 = vadd.f32 %v573, %v577
    %v579 = vadd.f32 %v574, %v577
    %v580 = vadd.f32 %v575, %v577
    %v581 = vadd.f32 %v576, %v577
    %582 = vst [vmem:[#allocation3] sm:$0xff] %v578
    %583 = vst [vmem:[#allocation3 + $0x8] sm:$0xff] %v579
    %584 = vst [vmem:[#allocation3 + $0x10] sm:$0xff] %v580
    %585 = vst [vmem:[#allocation3 + $0x18] sm:$0xff] %v581
    %v586 = vadd.f32 %v422, %v423
    %v587 = vadd.f32 %v586, %v424
    %v588 = vadd.f32 %v587, %v425
    %v589 = vrot.slane %v588, 4
    %v590 = vadd.f32 %v588, %v589
    %v591 = vrot.slane %v590, 2
    %v592 = vadd.f32 %v590, %v591
    %v593 = vrot.slane %v592, 1
    %v594 = vadd.f32 %v592, %v593
    %v595 = vmul.f32 %v422, %v422
    %v596 = vmul.f32 %v423, %v423
    %v597 = vmul.f32 %v424, %v424
    %v598 = vmul.f32 %v425, %v425
    %v599 = vadd.f32 %v595, %v596
    %v600 = vadd.f32 %v599, %v597
    %v601 = vadd.f32 %v600, %v598
    %v602 = vrot.slane %v601, 4
    %v603 = vadd.f32 %v601, %v602
    %v604 = vrot.slane %v603, 2
    %v605 = vadd.f32 %v603, %v604
    %v606 = vrot.slane %v605, 1
    %v607 = vadd.f32 %v605, %v606
    %v608 = vld [vmem:[%s15] sm:$0xff]
    %v609 = vld [vmem:[%s15 + $0x8] sm:$0xff]
    %v610 = vld [vmem:[%s15 + $0x10] sm:$0xff]
    %v611 = vld [vmem:[%s15 + $0x18] sm:$0xff]
    %v612 = vld [vmem:[%s15 + $0x20] sm:$0xff]
    %v613 = vld [vmem:[%s15 + $0x28] sm:$0xff]
    %v614 = vld [vmem:[%s15 + $0x30] sm:$0xff]
    %v615 = vld [vmem:[%s15 + $0x38] sm:$0xff]
    %v616 = vld [vmem:[%s15 + $0x40] sm:$0xff]
    %v617 = vld [vmem:[%s15 + $0x48] sm:$0xff]
    %v618 = vld [vmem:[%s15 + $0x50] sm:$0xff]
    %v619 = vld [vmem:[%s15 + $0x58] sm:$0xff]
    %v620 = vld [vmem:[%s15 + $0x60] sm:$0xff]
    %v621 = vld [vmem:[%s15 + $0x68] sm:$0xff]
    %v622 = vld [vmem:[%s15 + $0x70] sm:$0xff]
    %v623 = vld [vmem:[%s15 + $0x78] sm:$0xff]
    %624 = vmatpush.msra.mxu0 %v623
    %625 = vmatpush.msra.mxu0 %v622
    %626 = vmatpush.msra.mxu0 %v621
    %627 = vmatpush.msra.mxu0 %v620
    %628 = vmatpush.msra.mxu0 %v619
    %629 = vmatpush.msra.mxu0 %v618
    %630 = vmatpush.msra.mxu0 %v617
    %631 = vmatpush.msra.mxu0 %v616
    %632 = vmatpush.msra.mxu0 %v615
    %633 = vmatpush.msra.mxu0 %v614
    %634 = vmatpush.msra.mxu0 %v613
    %635 = vmatpush.msra.mxu0 %v612
    %636 = vmatpush.msra.mxu0 %v611
    %637 = vmatpush.msra.mxu0 %v610
    %638 = vmatpush.msra.mxu0 %v609
    %639 = vmatpush.msra.mxu0 %v608
    %640 = vmatmul.f32.gmra.mxu0 %v594
    %v641 = vpop.f32.mrf.mxu0
    %v642 = vadd.f32 0.0, %v641
    %643 = vdwg.mxu0
    %v644 = vmul.f32 %v642, 0.001953125
    %645 = vmatpush.msra.mxu0 %v623
    %646 = vmatpush.msra.mxu0 %v622
    %647 = vmatpush.msra.mxu0 %v621
    %648 = vmatpush.msra.mxu0 %v620
    %649 = vmatpush.msra.mxu0 %v619
    %650 = vmatpush.msra.mxu0 %v618
    %651 = vmatpush.msra.mxu0 %v617
    %652 = vmatpush.msra.mxu0 %v616
    %653 = vmatpush.msra.mxu0 %v615
    %654 = vmatpush.msra.mxu0 %v614
    %655 = vmatpush.msra.mxu0 %v613
    %656 = vmatpush.msra.mxu0 %v612
    %657 = vmatpush.msra.mxu0 %v611
    %658 = vmatpush.msra.mxu0 %v610
    %659 = vmatpush.msra.mxu0 %v609
    %660 = vmatpush.msra.mxu0 %v608
    %661 = vmatmul.f32.gmra.mxu0 %v607
    %v662 = vpop.f32.mrf.mxu0
    %v663 = vadd.f32 0.0, %v662
    %664 = vdwg.mxu0
    %v665 = vmul.f32 %v663, 0.001953125
    %v666 = vmul.f32 %v644, %v644
    %v667 = vsub.f32 %v665, %v666
    %v668 = vld [vmem:[%s7] sm:$0x1]
    %v669 = vadd.f32 %v667, 1e-05
    %v670 = vrsqrt.pop %v669
    %v671 = vmul.f32 %v670, %v669
    %v672 = vmul.f32 %v671, %v670
    %v673 = vmul.f32 0.5, %v672
    %v674 = vsub.f32 1.5, %v673
    %v675 = vmul.f32 %v670, %v674
    %vm676 = vweird.f32 %v669
    %vm677 = vweird.f32 %v670
    %vm678 = vmor %vm676, %vm677
    %v679 = vsel %vm678, %v670, %v675
    %v680 = vmul.f32 %v668, %v679
    %v681 = vld [vmem:[%s8] sm:$0x1]
    %v682 = vmul.f32 %v644, %v680
    %v683 = vsub.f32 %v681, %v682
    %v684 = vld [vmem:[%s16] sm:$0xff]
    %v686 = vsel %vm525, %v680, 0
    %688 = vmatpush.msra.mxu0 0.0
    %689 = vmatpush.msra.mxu0 0.0
    %690 = vmatpush.msra.mxu0 0.0
    %691 = vmatpush.msra.mxu0 0.0
    %692 = vmatpush.msra.mxu0 0.0
    %693 = vmatpush.msra.mxu0 0.0
    %694 = vmatpush.msra.mxu0 0.0
    %695 = vmatpush.msra.mxu0 0.0
    %696 = vmatpush.msra.mxu0 0.0
    %697 = vmatpush.msra.mxu0 0.0
    %698 = vmatpush.msra.mxu0 0.0
    %699 = vmatpush.msra.mxu0 0.0
    %700 = vmatpush.msra.mxu0 0.0
    %701 = vmatpush.msra.mxu0 0.0
    %702 = vmatpush.msra.mxu0 0.0
    %703 = vmatpush.msra.mxu0 %v684
    %704 = vmatmul.f32.gmra.mxu0 %v686
    %v705 = vpop.f32.mrf.mxu0
    %v706 = vadd.f32 0.0, %v705
    %707 = vdwg.mxu0
    %v709 = vsel %vm525, %v683, 0
    %711 = vmatpush.msra.mxu0 0.0
    %712 = vmatpush.msra.mxu0 0.0
    %713 = vmatpush.msra.mxu0 0.0
    %714 = vmatpush.msra.mxu0 0.0
    %715 = vmatpush.msra.mxu0 0.0
    %716 = vmatpush.msra.mxu0 0.0
    %717 = vmatpush.msra.mxu0 0.0
    %718 = vmatpush.msra.mxu0 0.0
    %719 = vmatpush.msra.mxu0 0.0
    %720 = vmatpush.msra.mxu0 0.0
    %721 = vmatpush.msra.mxu0 0.0
    %722 = vmatpush.msra.mxu0 0.0
    %723 = vmatpush.msra.mxu0 0.0
    %724 = vmatpush.msra.mxu0 0.0
    %725 = vmatpush.msra.mxu0 0.0
    %726 = vmatpush.msra.mxu0 %v684
    %727 = vmatmul.f32.gmra.mxu0 %v709
    %v728 = vpop.f32.mrf.mxu0
    %v729 = vadd.f32 0.0, %v728
    %730 = vdwg.mxu0
    %v731 = vperm.slane %v706, 0
    %v732 = vmul.f32 %v422, %v731
    %v733 = vmul.f32 %v423, %v731
    %v734 = vmul.f32 %v424, %v731
    %v735 = vmul.f32 %v425, %v731
    %v736 = vperm.slane %v729, 0
    %v737 = vadd.f32 %v732, %v736
    %v738 = vadd.f32 %v733, %v736
    %v739 = vadd.f32 %v734, %v736
    %v740 = vadd.f32 %v735, %v736
    %v741 = vmax.f32 %v737, 0.0
    %v742 = vmax.f32 %v738, 0.0
    %v743 = vmax.f32 %v739, 0.0
    %v744 = vmax.f32 %v740, 0.0
    %745 = vst [vmem:[#allocation2 + $0x1] sm:$0xff] %v741
    %746 = vst [vmem:[#allocation2 + $0x9] sm:$0xff] %v742
    %747 = vst [vmem:[#allocation2 + $0x19] sm:$0xff] %v743
    %748 = vst [vmem:[#allocation2 + $0x21] sm:$0xff] %v744
    %v749 = vld [vmem:[#allocation2] sm:$0xff]
    %v750 = vld [vmem:[#allocation2 + $0x8] sm:$0xff]
    %v751 = vld [vmem:[#allocation2 + $0x18] sm:$0xff]
    %v752 = vld [vmem:[#allocation2 + $0x20] sm:$0xff]
    %v753 = vld [vmem:[#allocation9] sm:$0xff]
    %v754 = vld [vmem:[#allocation9 + $0x8] sm:$0xff]
    %v755 = vld [vmem:[#allocation9 + $0x10] sm:$0xff]
    %v756 = vld [vmem:[#allocation9 + $0x18] sm:$0xff]
    %v757 = vld [vmem:[#allocation9 + $0x20] sm:$0xff]
    %v758 = vld [vmem:[#allocation9 + $0x28] sm:$0xff]
    %v759 = vld [vmem:[#allocation9 + $0x30] sm:$0xff]
    %v760 = vld [vmem:[#allocation9 + $0x38] sm:$0xff]
    %v761 = vld [vmem:[#allocation9 + $0x40] sm:$0xff]
    %v762 = vld [vmem:[#allocation9 + $0x48] sm:$0xff]
    %v763 = vld [vmem:[#allocation9 + $0x50] sm:$0xff]
    %v764 = vld [vmem:[#allocation9 + $0x58] sm:$0xff]
    %v765 = vld [vmem:[#allocation9 + $0x60] sm:$0xff]
    %v766 = vld [vmem:[#allocation9 + $0x68] sm:$0xff]
    %v767 = vld [vmem:[#allocation9 + $0x70] sm:$0xff]
    %v768 = vld [vmem:[#allocation9 + $0x78] sm:$0xff]
    %v769 = vld [vmem:[#allocation2 + $0x1] sm:$0xff]
    %v770 = vld [vmem:[#allocation2 + $0x9] sm:$0xff]
    %v771 = vld [vmem:[#allocation2 + $0x19] sm:$0xff]
    %v772 = vld [vmem:[#allocation2 + $0x21] sm:$0xff]
    %s773 = scalar_lea.vmem [#allocation9], 128
    %v774 = vld [vmem:[%s773] sm:$0xff]
    %v775 = vld [vmem:[%s773 + $0x8] sm:$0xff]
    %v776 = vld [vmem:[%s773 + $0x10] sm:$0xff]
    %v777 = vld [vmem:[%s773 + $0x18] sm:$0xff]
    %v778 = vld [vmem:[%s773 + $0x20] sm:$0xff]
    %v779 = vld [vmem:[%s773 + $0x28] sm:$0xff]
    %v780 = vld [vmem:[%s773 + $0x30] sm:$0xff]
    %v781 = vld [vmem:[%s773 + $0x38] sm:$0xff]
    %v782 = vld [vmem:[%s773 + $0x40] sm:$0xff]
    %v783 = vld [vmem:[%s773 + $0x48] sm:$0xff]
    %v784 = vld [vmem:[%s773 + $0x50] sm:$0xff]
    %v785 = vld [vmem:[%s773 + $0x58] sm:$0xff]
    %v786 = vld [vmem:[%s773 + $0x60] sm:$0xff]
    %v787 = vld [vmem:[%s773 + $0x68] sm:$0xff]
    %v788 = vld [vmem:[%s773 + $0x70] sm:$0xff]
    %v789 = vld [vmem:[%s773 + $0x78] sm:$0xff]
    %790 = vmatpush.msra.mxu0 %v789
    %791 = vmatpush.msra.mxu0 %v788
    %792 = vmatpush.msra.mxu0 %v787
    %793 = vmatpush.msra.mxu0 %v786
    %794 = vmatpush.msra.mxu0 %v785
    %795 = vmatpush.msra.mxu0 %v784
    %796 = vmatpush.msra.mxu0 %v783
    %797 = vmatpush.msra.mxu0 %v782
    %798 = vmatpush.msra.mxu0 %v781
    %799 = vmatpush.msra.mxu0 %v780
    %800 = vmatpush.msra.mxu0 %v779
    %801 = vmatpush.msra.mxu0 %v778
    %802 = vmatpush.msra.mxu0 %v777
    %803 = vmatpush.msra.mxu0 %v776
    %804 = vmatpush.msra.mxu0 %v775
    %805 = vmatpush.msra.mxu0 %v774
    %806 = vmatmul.f32.gmra.mxu0 %v769
    %v807 = vpop.f32.mrf.mxu0
    %v808 = vadd.f32 0.0, %v807
    %809 = vmatmul.f32.gmra.mxu0 %v770
    %v810 = vpop.f32.mrf.mxu0
    %v811 = vadd.f32 0.0, %v810
    %812 = vmatmul.f32.gmra.mxu0 %v771
    %v813 = vpop.f32.mrf.mxu0
    %v814 = vadd.f32 0.0, %v813
    %815 = vmatmul.f32.gmra.mxu0 %v772
    %v816 = vpop.f32.mrf.mxu0
    %v817 = vadd.f32 0.0, %v816
    %818 = vdwg.mxu0
    %819 = vmatpush.msra.mxu0 %v768
    %820 = vmatpush.msra.mxu0 %v767
    %821 = vmatpush.msra.mxu0 %v766
    %822 = vmatpush.msra.mxu0 %v765
    %823 = vmatpush.msra.mxu0 %v764
    %824 = vmatpush.msra.mxu0 %v763
    %825 = vmatpush.msra.mxu0 %v762
    %826 = vmatpush.msra.mxu0 %v761
    %827 = vmatpush.msra.mxu0 %v760
    %828 = vmatpush.msra.mxu0 %v759
    %829 = vmatpush.msra.mxu0 %v758
    %830 = vmatpush.msra.mxu0 %v757
    %831 = vmatpush.msra.mxu0 %v756
    %832 = vmatpush.msra.mxu0 %v755
    %833 = vmatpush.msra.mxu0 %v754
    %834 = vmatpush.msra.mxu0 %v753
    %835 = vmatmul.f32.gmra.mxu0 %v749
    %v836 = vpop.f32.mrf.mxu0
    %v837 = vadd.f32 %v808, %v836
    %838 = vmatmul.f32.gmra.mxu0 %v750
    %v839 = vpop.f32.mrf.mxu0
    %v840 = vadd.f32 %v811, %v839
    %841 = vmatmul.f32.gmra.mxu0 %v751
    %v842 = vpop.f32.mrf.mxu0
    %v843 = vadd.f32 %v814, %v842
    %844 = vmatmul.f32.gmra.mxu0 %v752
    %v845 = vpop.f32.mrf.mxu0
    %v846 = vadd.f32 %v817, %v845
    %847 = vdwg.mxu0
    %v848 = vld [vmem:[#allocation2 + $0x2] sm:$0xff]
    %v849 = vld [vmem:[#allocation2 + $0xa] sm:$0xff]
    %v850 = vld [vmem:[#allocation2 + $0x1a] sm:$0xff]
    %v851 = vld [vmem:[#allocation2 + $0x22] sm:$0xff]
    %s852 = scalar_lea.vmem [#allocation9], 256
    %v853 = vld [vmem:[%s852] sm:$0xff]
    %v854 = vld [vmem:[%s852 + $0x8] sm:$0xff]
    %v855 = vld [vmem:[%s852 + $0x10] sm:$0xff]
    %v856 = vld [vmem:[%s852 + $0x18] sm:$0xff]
    %v857 = vld [vmem:[%s852 + $0x20] sm:$0xff]
    %v858 = vld [vmem:[%s852 + $0x28] sm:$0xff]
    %v859 = vld [vmem:[%s852 + $0x30] sm:$0xff]
    %v860 = vld [vmem:[%s852 + $0x38] sm:$0xff]
    %v861 = vld [vmem:[%s852 + $0x40] sm:$0xff]
    %v862 = vld [vmem:[%s852 + $0x48] sm:$0xff]
    %v863 = vld [vmem:[%s852 + $0x50] sm:$0xff]
    %v864 = vld [vmem:[%s852 + $0x58] sm:$0xff]
    %v865 = vld [vmem:[%s852 + $0x60] sm:$0xff]
    %v866 = vld [vmem:[%s852 + $0x68] sm:$0xff]
    %v867 = vld [vmem:[%s852 + $0x70] sm:$0xff]
    %v868 = vld [vmem:[%s852 + $0x78] sm:$0xff]
    %869 = vmatpush.msra.mxu0 %v868
    %870 = vmatpush.msra.mxu0 %v867
    %871 = vmatpush.msra.mxu0 %v866
    %872 = vmatpush.msra.mxu0 %v865
    %873 = vmatpush.msra.mxu0 %v864
    %874 = vmatpush.msra.mxu0 %v863
    %875 = vmatpush.msra.mxu0 %v862
    %876 = vmatpush.msra.mxu0 %v861
    %877 = vmatpush.msra.mxu0 %v860
    %878 = vmatpush.msra.mxu0 %v859
    %879 = vmatpush.msra.mxu0 %v858
    %880 = vmatpush.msra.mxu0 %v857
    %881 = vmatpush.msra.mxu0 %v856
    %882 = vmatpush.msra.mxu0 %v855
    %883 = vmatpush.msra.mxu0 %v854
    %884 = vmatpush.msra.mxu0 %v853
    %885 = vmatmul.f32.gmra.mxu0 %v848
    %v886 = vpop.f32.mrf.mxu0
    %v887 = vadd.f32 0.0, %v886
    %888 = vmatmul.f32.gmra.mxu0 %v849
    %v889 = vpop.f32.mrf.mxu0
    %v890 = vadd.f32 0.0, %v889
    %891 = vmatmul.f32.gmra.mxu0 %v850
    %v892 = vpop.f32.mrf.mxu0
    %v893 = vadd.f32 0.0, %v892
    %894 = vmatmul.f32.gmra.mxu0 %v851
    %v895 = vpop.f32.mrf.mxu0
    %v896 = vadd.f32 0.0, %v895
    %897 = vdwg.mxu0
    %v898 = vadd.f32 %v837, %v887
    %v899 = vadd.f32 %v840, %v890
    %v900 = vadd.f32 %v843, %v893
    %v901 = vadd.f32 %v846, %v896
    %v902 = vadd.f32 %v898, %v899
    %v903 = vadd.f32 %v902, %v900
    %v904 = vadd.f32 %v903, %v901
    %v905 = vrot.slane %v904, 4
    %v906 = vadd.f32 %v904, %v905
    %v907 = vrot.slane %v906, 2
    %v908 = vadd.f32 %v906, %v907
    %v909 = vrot.slane %v908, 1
    %v910 = vadd.f32 %v908, %v909
    %v911 = vmul.f32 %v898, %v898
    %v912 = vmul.f32 %v899, %v899
    %v913 = vmul.f32 %v900, %v900
    %v914 = vmul.f32 %v901, %v901
    %v915 = vadd.f32 %v911, %v912
    %v916 = vadd.f32 %v915, %v913
    %v917 = vadd.f32 %v916, %v914
    %v918 = vrot.slane %v917, 4
    %v919 = vadd.f32 %v917, %v918
    %v920 = vrot.slane %v919, 2
    %v921 = vadd.f32 %v919, %v920
    %v922 = vrot.slane %v921, 1
    %v923 = vadd.f32 %v921, %v922
    %v924 = vld [vmem:[%s15] sm:$0xff]
    %v925 = vld [vmem:[%s15 + $0x8] sm:$0xff]
    %v926 = vld [vmem:[%s15 + $0x10] sm:$0xff]
    %v927 = vld [vmem:[%s15 + $0x18] sm:$0xff]
    %v928 = vld [vmem:[%s15 + $0x20] sm:$0xff]
    %v929 = vld [vmem:[%s15 + $0x28] sm:$0xff]
    %v930 = vld [vmem:[%s15 + $0x30] sm:$0xff]
    %v931 = vld [vmem:[%s15 + $0x38] sm:$0xff]
    %v932 = vld [vmem:[%s15 + $0x40] sm:$0xff]
    %v933 = vld [vmem:[%s15 + $0x48] sm:$0xff]
    %v934 = vld [vmem:[%s15 + $0x50] sm:$0xff]
    %v935 = vld [vmem:[%s15 + $0x58] sm:$0xff]
    %v936 = vld [vmem:[%s15 + $0x60] sm:$0xff]
    %v937 = vld [vmem:[%s15 + $0x68] sm:$0xff]
    %v938 = vld [vmem:[%s15 + $0x70] sm:$0xff]
    %v939 = vld [vmem:[%s15 + $0x78] sm:$0xff]
    %940 = vmatpush.msra.mxu0 %v939
    %941 = vmatpush.msra.mxu0 %v938
    %942 = vmatpush.msra.mxu0 %v937
    %943 = vmatpush.msra.mxu0 %v936
    %944 = vmatpush.msra.mxu0 %v935
    %945 = vmatpush.msra.mxu0 %v934
    %946 = vmatpush.msra.mxu0 %v933
    %947 = vmatpush.msra.mxu0 %v932
    %948 = vmatpush.msra.mxu0 %v931
    %949 = vmatpush.msra.mxu0 %v930
    %950 = vmatpush.msra.mxu0 %v929
    %951 = vmatpush.msra.mxu0 %v928
    %952 = vmatpush.msra.mxu0 %v927
    %953 = vmatpush.msra.mxu0 %v926
    %954 = vmatpush.msra.mxu0 %v925
    %955 = vmatpush.msra.mxu0 %v924
    %956 = vmatmul.f32.gmra.mxu0 %v910
    %v957 = vpop.f32.mrf.mxu0
    %v958 = vadd.f32 0.0, %v957
    %959 = vdwg.mxu0
    %v960 = vmul.f32 %v958, 0.001953125
    %961 = vmatpush.msra.mxu0 %v939
    %962 = vmatpush.msra.mxu0 %v938
    %963 = vmatpush.msra.mxu0 %v937
    %964 = vmatpush.msra.mxu0 %v936
    %965 = vmatpush.msra.mxu0 %v935
    %966 = vmatpush.msra.mxu0 %v934
    %967 = vmatpush.msra.mxu0 %v933
    %968 = vmatpush.msra.mxu0 %v932
    %969 = vmatpush.msra.mxu0 %v931
    %970 = vmatpush.msra.mxu0 %v930
    %971 = vmatpush.msra.mxu0 %v929
    %972 = vmatpush.msra.mxu0 %v928
    %973 = vmatpush.msra.mxu0 %v927
    %974 = vmatpush.msra.mxu0 %v926
    %975 = vmatpush.msra.mxu0 %v925
    %976 = vmatpush.msra.mxu0 %v924
    %977 = vmatmul.f32.gmra.mxu0 %v923
    %v978 = vpop.f32.mrf.mxu0
    %v979 = vadd.f32 0.0, %v978
    %980 = vdwg.mxu0
    %v981 = vmul.f32 %v979, 0.001953125
    %v982 = vmul.f32 %v960, %v960
    %v983 = vsub.f32 %v981, %v982
    %v984 = vld [vmem:[%s9] sm:$0x1]
    %v985 = vadd.f32 %v983, 1e-05
    %v986 = vrsqrt.pop %v985
    %v987 = vmul.f32 %v986, %v985
    %v988 = vmul.f32 %v987, %v986
    %v989 = vmul.f32 0.5, %v988
    %v990 = vsub.f32 1.5, %v989
    %v991 = vmul.f32 %v986, %v990
    %vm992 = vweird.f32 %v985
    %vm993 = vweird.f32 %v986
    %vm994 = vmor %vm992, %vm993
    %v995 = vsel %vm994, %v986, %v991
    %v996 = vmul.f32 %v984, %v995
    %v997 = vld [vmem:[%s10] sm:$0x1]
    %v998 = vmul.f32 %v960, %v996
    %v999 = vsub.f32 %v997, %v998
    %v1000 = vld [vmem:[%s16] sm:$0xff]
    %v1002 = vsel %vm525, %v996, 0
    %1004 = vmatpush.msra.mxu0 0.0
    %1005 = vmatpush.msra.mxu0 0.0
    %1006 = vmatpush.msra.mxu0 0.0
    %1007 = vmatpush.msra.mxu0 0.0
    %1008 = vmatpush.msra.mxu0 0.0
    %1009 = vmatpush.msra.mxu0 0.0
    %1010 = vmatpush.msra.mxu0 0.0
    %1011 = vmatpush.msra.mxu0 0.0
    %1012 = vmatpush.msra.mxu0 0.0
    %1013 = vmatpush.msra.mxu0 0.0
    %1014 = vmatpush.msra.mxu0 0.0
    %1015 = vmatpush.msra.mxu0 0.0
    %1016 = vmatpush.msra.mxu0 0.0
    %1017 = vmatpush.msra.mxu0 0.0
    %1018 = vmatpush.msra.mxu0 0.0
    %1019 = vmatpush.msra.mxu0 %v1000
    %1020 = vmatmul.f32.gmra.mxu0 %v1002
    %v1021 = vpop.f32.mrf.mxu0
    %v1022 = vadd.f32 0.0, %v1021
    %1023 = vdwg.mxu0
    %v1025 = vsel %vm525, %v999, 0
    %1027 = vmatpush.msra.mxu0 0.0
    %1028 = vmatpush.msra.mxu0 0.0
    %1029 = vmatpush.msra.mxu0 0.0
    %1030 = vmatpush.msra.mxu0 0.0
    %1031 = vmatpush.msra.mxu0 0.0
    %1032 = vmatpush.msra.mxu0 0.0
    %1033 = vmatpush.msra.mxu0 0.0
    %1034 = vmatpush.msra.mxu0 0.0
    %1035 = vmatpush.msra.mxu0 0.0
    %1036 = vmatpush.msra.mxu0 0.0
    %1037 = vmatpush.msra.mxu0 0.0
    %1038 = vmatpush.msra.mxu0 0.0
    %1039 = vmatpush.msra.mxu0 0.0
    %1040 = vmatpush.msra.mxu0 0.0
    %1041 = vmatpush.msra.mxu0 0.0
    %1042 = vmatpush.msra.mxu0 %v1000
    %1043 = vmatmul.f32.gmra.mxu0 %v1025
    %v1044 = vpop.f32.mrf.mxu0
    %v1045 = vadd.f32 0.0, %v1044
    %1046 = vdwg.mxu0
    %v1047 = vperm.slane %v1022, 0
    %v1048 = vmul.f32 %v898, %v1047
    %v1049 = vmul.f32 %v899, %v1047
    %v1050 = vmul.f32 %v900, %v1047
    %v1051 = vmul.f32 %v901, %v1047
    %v1052 = vperm.slane %v1045, 0
    %v1053 = vadd.f32 %v1048, %v1052
    %v1054 = vadd.f32 %v1049, %v1052
    %v1055 = vadd.f32 %v1050, %v1052
    %v1056 = vadd.f32 %v1051, %v1052
    %v1057 = vmax.f32 %v1053, 0.0
    %v1058 = vmax.f32 %v1054, 0.0
    %v1059 = vmax.f32 %v1055, 0.0
    %v1060 = vmax.f32 %v1056, 0.0
    %1061 = vst [vmem:[#allocation2 + $0x1] sm:$0xff] %v1057
    %1062 = vst [vmem:[#allocation2 + $0x9] sm:$0xff] %v1058
    %1063 = vst [vmem:[#allocation2 + $0x19] sm:$0xff] %v1059
    %1064 = vst [vmem:[#allocation2 + $0x21] sm:$0xff] %v1060
    %v1065 = vld [vmem:[#allocation2] sm:$0xff]
    %v1066 = vld [vmem:[#allocation2 + $0x8] sm:$0xff]
    %v1067 = vld [vmem:[#allocation2 + $0x18] sm:$0xff]
    %v1068 = vld [vmem:[#allocation2 + $0x20] sm:$0xff]
    %v1069 = vld [vmem:[#allocation10] sm:$0xff]
    %v1070 = vld [vmem:[#allocation10 + $0x8] sm:$0xff]
    %v1071 = vld [vmem:[#allocation10 + $0x10] sm:$0xff]
    %v1072 = vld [vmem:[#allocation10 + $0x18] sm:$0xff]
    %v1073 = vld [vmem:[#allocation10 + $0x20] sm:$0xff]
    %v1074 = vld [vmem:[#allocation10 + $0x28] sm:$0xff]
    %v1075 = vld [vmem:[#allocation10 + $0x30] sm:$0xff]
    %v1076 = vld [vmem:[#allocation10 + $0x38] sm:$0xff]
    %v1077 = vld [vmem:[#allocation10 + $0x40] sm:$0xff]
    %v1078 = vld [vmem:[#allocation10 + $0x48] sm:$0xff]
    %v1079 = vld [vmem:[#allocation10 + $0x50] sm:$0xff]
    %v1080 = vld [vmem:[#allocation10 + $0x58] sm:$0xff]
    %v1081 = vld [vmem:[#allocation10 + $0x60] sm:$0xff]
    %v1082 = vld [vmem:[#allocation10 + $0x68] sm:$0xff]
    %v1083 = vld [vmem:[#allocation10 + $0x70] sm:$0xff]
    %v1084 = vld [vmem:[#allocation10 + $0x78] sm:$0xff]
    %v1085 = vld [vmem:[#allocation2 + $0x1] sm:$0xff]
    %v1086 = vld [vmem:[#allocation2 + $0x9] sm:$0xff]
    %v1087 = vld [vmem:[#allocation2 + $0x19] sm:$0xff]
    %v1088 = vld [vmem:[#allocation2 + $0x21] sm:$0xff]
    %s1089 = scalar_lea.vmem [#allocation10], 128
    %v1090 = vld [vmem:[%s1089] sm:$0xff]
    %v1091 = vld [vmem:[%s1089 + $0x8] sm:$0xff]
    %v1092 = vld [vmem:[%s1089 + $0x10] sm:$0xff]
    %v1093 = vld [vmem:[%s1089 + $0x18] sm:$0xff]
    %v1094 = vld [vmem:[%s1089 + $0x20] sm:$0xff]
    %v1095 = vld [vmem:[%s1089 + $0x28] sm:$0xff]
    %v1096 = vld [vmem:[%s1089 + $0x30] sm:$0xff]
    %v1097 = vld [vmem:[%s1089 + $0x38] sm:$0xff]
    %v1098 = vld [vmem:[%s1089 + $0x40] sm:$0xff]
    %v1099 = vld [vmem:[%s1089 + $0x48] sm:$0xff]
    %v1100 = vld [vmem:[%s1089 + $0x50] sm:$0xff]
    %v1101 = vld [vmem:[%s1089 + $0x58] sm:$0xff]
    %v1102 = vld [vmem:[%s1089 + $0x60] sm:$0xff]
    %v1103 = vld [vmem:[%s1089 + $0x68] sm:$0xff]
    %v1104 = vld [vmem:[%s1089 + $0x70] sm:$0xff]
    %v1105 = vld [vmem:[%s1089 + $0x78] sm:$0xff]
    %1106 = vmatpush.msra.mxu0 %v1105
    %1107 = vmatpush.msra.mxu0 %v1104
    %1108 = vmatpush.msra.mxu0 %v1103
    %1109 = vmatpush.msra.mxu0 %v1102
    %1110 = vmatpush.msra.mxu0 %v1101
    %1111 = vmatpush.msra.mxu0 %v1100
    %1112 = vmatpush.msra.mxu0 %v1099
    %1113 = vmatpush.msra.mxu0 %v1098
    %1114 = vmatpush.msra.mxu0 %v1097
    %1115 = vmatpush.msra.mxu0 %v1096
    %1116 = vmatpush.msra.mxu0 %v1095
    %1117 = vmatpush.msra.mxu0 %v1094
    %1118 = vmatpush.msra.mxu0 %v1093
    %1119 = vmatpush.msra.mxu0 %v1092
    %1120 = vmatpush.msra.mxu0 %v1091
    %1121 = vmatpush.msra.mxu0 %v1090
    %1122 = vmatmul.f32.gmra.mxu0 %v1085
    %v1123 = vpop.f32.mrf.mxu0
    %v1124 = vadd.f32 0.0, %v1123
    %1125 = vmatmul.f32.gmra.mxu0 %v1086
    %v1126 = vpop.f32.mrf.mxu0
    %v1127 = vadd.f32 0.0, %v1126
    %1128 = vmatmul.f32.gmra.mxu0 %v1087
    %v1129 = vpop.f32.mrf.mxu0
    %v1130 = vadd.f32 0.0, %v1129
    %1131 = vmatmul.f32.gmra.mxu0 %v1088
    %v1132 = vpop.f32.mrf.mxu0
    %v1133 = vadd.f32 0.0, %v1132
    %1134 = vdwg.mxu0
    %1135 = vmatpush.msra.mxu0 %v1084
    %1136 = vmatpush.msra.mxu0 %v1083
    %1137 = vmatpush.msra.mxu0 %v1082
    %1138 = vmatpush.msra.mxu0 %v1081
    %1139 = vmatpush.msra.mxu0 %v1080
    %1140 = vmatpush.msra.mxu0 %v1079
    %1141 = vmatpush.msra.mxu0 %v1078
    %1142 = vmatpush.msra.mxu0 %v1077
    %1143 = vmatpush.msra.mxu0 %v1076
    %1144 = vmatpush.msra.mxu0 %v1075
    %1145 = vmatpush.msra.mxu0 %v1074
    %1146 = vmatpush.msra.mxu0 %v1073
    %1147 = vmatpush.msra.mxu0 %v1072
    %1148 = vmatpush.msra.mxu0 %v1071
    %1149 = vmatpush.msra.mxu0 %v1070
    %1150 = vmatpush.msra.mxu0 %v1069
    %1151 = vmatmul.f32.gmra.mxu0 %v1065
    %v1152 = vpop.f32.mrf.mxu0
    %v1153 = vadd.f32 %v1124, %v1152
    %1154 = vmatmul.f32.gmra.mxu0 %v1066
    %v1155 = vpop.f32.mrf.mxu0
    %v1156 = vadd.f32 %v1127, %v1155
    %1157 = vmatmul.f32.gmra.mxu0 %v1067
    %v1158 = vpop.f32.mrf.mxu0
    %v1159 = vadd.f32 %v1130, %v1158
    %1160 = vmatmul.f32.gmra.mxu0 %v1068
    %v1161 = vpop.f32.mrf.mxu0
    %v1162 = vadd.f32 %v1133, %v1161
    %1163 = vdwg.mxu0
    %v1164 = vld [vmem:[#allocation2 + $0x2] sm:$0xff]
    %v1165 = vld [vmem:[#allocation2 + $0xa] sm:$0xff]
    %v1166 = vld [vmem:[#allocation2 + $0x1a] sm:$0xff]
    %v1167 = vld [vmem:[#allocation2 + $0x22] sm:$0xff]
    %s1168 = scalar_lea.vmem [#allocation10], 256
    %v1169 = vld [vmem:[%s1168] sm:$0xff]
    %v1170 = vld [vmem:[%s1168 + $0x8] sm:$0xff]
    %v1171 = vld [vmem:[%s1168 + $0x10] sm:$0xff]
    %v1172 = vld [vmem:[%s1168 + $0x18] sm:$0xff]
    %v1173 = vld [vmem:[%s1168 + $0x20] sm:$0xff]
    %v1174 = vld [vmem:[%s1168 + $0x28] sm:$0xff]
    %v1175 = vld [vmem:[%s1168 + $0x30] sm:$0xff]
    %v1176 = vld [vmem:[%s1168 + $0x38] sm:$0xff]
    %v1177 = vld [vmem:[%s1168 + $0x40] sm:$0xff]
    %v1178 = vld [vmem:[%s1168 + $0x48] sm:$0xff]
    %v1179 = vld [vmem:[%s1168 + $0x50] sm:$0xff]
    %v1180 = vld [vmem:[%s1168 + $0x58] sm:$0xff]
    %v1181 = vld [vmem:[%s1168 + $0x60] sm:$0xff]
    %v1182 = vld [vmem:[%s1168 + $0x68] sm:$0xff]
    %v1183 = vld [vmem:[%s1168 + $0x70] sm:$0xff]
    %v1184 = vld [vmem:[%s1168 + $0x78] sm:$0xff]
    %1185 = vmatpush.msra.mxu0 %v1184
    %1186 = vmatpush.msra.mxu0 %v1183
    %1187 = vmatpush.msra.mxu0 %v1182
    %1188 = vmatpush.msra.mxu0 %v1181
    %1189 = vmatpush.msra.mxu0 %v1180
    %1190 = vmatpush.msra.mxu0 %v1179
    %1191 = vmatpush.msra.mxu0 %v1178
    %1192 = vmatpush.msra.mxu0 %v1177
    %1193 = vmatpush.msra.mxu0 %v1176
    %1194 = vmatpush.msra.mxu0 %v1175
    %1195 = vmatpush.msra.mxu0 %v1174
    %1196 = vmatpush.msra.mxu0 %v1173
    %1197 = vmatpush.msra.mxu0 %v1172
    %1198 = vmatpush.msra.mxu0 %v1171
    %1199 = vmatpush.msra.mxu0 %v1170
    %1200 = vmatpush.msra.mxu0 %v1169
    %1201 = vmatmul.f32.gmra.mxu0 %v1164
    %v1202 = vpop.f32.mrf.mxu0
    %v1203 = vadd.f32 0.0, %v1202
    %1204 = vmatmul.f32.gmra.mxu0 %v1165
    %v1205 = vpop.f32.mrf.mxu0
    %v1206 = vadd.f32 0.0, %v1205
    %1207 = vmatmul.f32.gmra.mxu0 %v1166
    %v1208 = vpop.f32.mrf.mxu0
    %v1209 = vadd.f32 0.0, %v1208
    %1210 = vmatmul.f32.gmra.mxu0 %v1167
    %v1211 = vpop.f32.mrf.mxu0
    %v1212 = vadd.f32 0.0, %v1211
    %1213 = vdwg.mxu0
    %v1214 = vadd.f32 %v1153, %v1203
    %v1215 = vadd.f32 %v1156, %v1206
    %v1216 = vadd.f32 %v1159, %v1209
    %v1217 = vadd.f32 %v1162, %v1212
    %v1218 = vld [vmem:[#allocation3] sm:$0xff]
    %v1219 = vld [vmem:[#allocation3 + $0x8] sm:$0xff]
    %v1220 = vld [vmem:[#allocation3 + $0x10] sm:$0xff]
    %v1221 = vld [vmem:[#allocation3 + $0x18] sm:$0xff]
    %v1222 = vadd.f32 %v1214, %v1215
    %v1223 = vadd.f32 %v1222, %v1216
    %v1224 = vadd.f32 %v1223, %v1217
    %v1225 = vrot.slane %v1224, 4
    %v1226 = vadd.f32 %v1224, %v1225
    %v1227 = vrot.slane %v1226, 2
    %v1228 = vadd.f32 %v1226, %v1227
    %v1229 = vrot.slane %v1228, 1
    %v1230 = vadd.f32 %v1228, %v1229
    %v1231 = vmul.f32 %v1214, %v1214
    %v1232 = vmul.f32 %v1215, %v1215
    %v1233 = vmul.f32 %v1216, %v1216
    %v1234 = vmul.f32 %v1217, %v1217
    %v1235 = vadd.f32 %v1231, %v1232
    %v1236 = vadd.f32 %v1235, %v1233
    %v1237 = vadd.f32 %v1236, %v1234
    %v1238 = vrot.slane %v1237, 4
    %v1239 = vadd.f32 %v1237, %v1238
    %v1240 = vrot.slane %v1239, 2
    %v1241 = vadd.f32 %v1239, %v1240
    %v1242 = vrot.slane %v1241, 1
    %v1243 = vadd.f32 %v1241, %v1242
    %v1244 = vld [vmem:[%s13] sm:$0xff]
    %v1245 = vld [vmem:[%s13 + $0x8] sm:$0xff]
    %v1246 = vld [vmem:[%s13 + $0x10] sm:$0xff]
    %v1247 = vld [vmem:[%s13 + $0x18] sm:$0xff]
    %v1248 = vld [vmem:[%s13 + $0x20] sm:$0xff]
    %v1249 = vld [vmem:[%s13 + $0x28] sm:$0xff]
    %v1250 = vld [vmem:[%s13 + $0x30] sm:$0xff]
    %v1251 = vld [vmem:[%s13 + $0x38] sm:$0xff]
    %v1252 = vld [vmem:[%s13 + $0x40] sm:$0xff]
    %v1253 = vld [vmem:[%s13 + $0x48] sm:$0xff]
    %v1254 = vld [vmem:[%s13 + $0x50] sm:$0xff]
    %v1255 = vld [vmem:[%s13 + $0x58] sm:$0xff]
    %v1256 = vld [vmem:[%s13 + $0x60] sm:$0xff]
    %v1257 = vld [vmem:[%s13 + $0x68] sm:$0xff]
    %v1258 = vld [vmem:[%s13 + $0x70] sm:$0xff]
    %v1259 = vld [vmem:[%s13 + $0x78] sm:$0xff]
    %1260 = vmatpush.msra.mxu0 %v1259
    %1261 = vmatpush.msra.mxu0 %v1258
    %1262 = vmatpush.msra.mxu0 %v1257
    %1263 = vmatpush.msra.mxu0 %v1256
    %1264 = vmatpush.msra.mxu0 %v1255
    %1265 = vmatpush.msra.mxu0 %v1254
    %1266 = vmatpush.msra.mxu0 %v1253
    %1267 = vmatpush.msra.mxu0 %v1252
    %1268 = vmatpush.msra.mxu0 %v1251
    %1269 = vmatpush.msra.mxu0 %v1250
    %1270 = vmatpush.msra.mxu0 %v1249
    %1271 = vmatpush.msra.mxu0 %v1248
    %1272 = vmatpush.msra.mxu0 %v1247
    %1273 = vmatpush.msra.mxu0 %v1246
    %1274 = vmatpush.msra.mxu0 %v1245
    %1275 = vmatpush.msra.mxu0 %v1244
    %1276 = vmatmul.f32.gmra.mxu0 %v1230
    %v1277 = vpop.f32.mrf.mxu0
    %v1278 = vadd.f32 0.0, %v1277
    %1279 = vdwg.mxu0
    %v1280 = vmul.f32 %v1278, 0.001953125
    %1281 = vmatpush.msra.mxu0 %v1259
    %1282 = vmatpush.msra.mxu0 %v1258
    %1283 = vmatpush.msra.mxu0 %v1257
    %1284 = vmatpush.msra.mxu0 %v1256
    %1285 = vmatpush.msra.mxu0 %v1255
    %1286 = vmatpush.msra.mxu0 %v1254
    %1287 = vmatpush.msra.mxu0 %v1253
    %1288 = vmatpush.msra.mxu0 %v1252
    %1289 = vmatpush.msra.mxu0 %v1251
    %1290 = vmatpush.msra.mxu0 %v1250
    %1291 = vmatpush.msra.mxu0 %v1249
    %1292 = vmatpush.msra.mxu0 %v1248
    %1293 = vmatpush.msra.mxu0 %v1247
    %1294 = vmatpush.msra.mxu0 %v1246
    %1295 = vmatpush.msra.mxu0 %v1245
    %1296 = vmatpush.msra.mxu0 %v1244
    %1297 = vmatmul.f32.gmra.mxu0 %v1243
    %v1298 = vpop.f32.mrf.mxu0
    %v1299 = vadd.f32 0.0, %v1298
    %1300 = vdwg.mxu0
    %v1301 = vmul.f32 %v1299, 0.001953125
    %v1302 = vmul.f32 %v1280, %v1280
    %v1303 = vsub.f32 %v1301, %v1302
    %v1304 = vld [vmem:[%s11] sm:$0x1]
    %v1305 = vadd.f32 %v1303, 1e-05
    %v1306 = vrsqrt.pop %v1305
    %v1307 = vmul.f32 %v1306, %v1305
    %v1308 = vmul.f32 %v1307, %v1306
    %v1309 = vmul.f32 0.5, %v1308
    %v1310 = vsub.f32 1.5, %v1309
    %v1311 = vmul.f32 %v1306, %v1310
    %vm1312 = vweird.f32 %v1305
    %vm1313 = vweird.f32 %v1306
    %vm1314 = vmor %vm1312, %vm1313
    %v1315 = vsel %vm1314, %v1306, %v1311
    %v1316 = vmul.f32 %v1304, %v1315
    %v1317 = vld [vmem:[%s12] sm:$0x1]
    %v1318 = vmul.f32 %v1280, %v1316
    %v1319 = vsub.f32 %v1317, %v1318
    %v1320 = vld [vmem:[%s14] sm:$0xff]
    %v1322 = vsel %vm525, %v1316, 0
    %1324 = vmatpush.msra.mxu0 0.0
    %1325 = vmatpush.msra.mxu0 0.0
    %1326 = vmatpush.msra.mxu0 0.0
    %1327 = vmatpush.msra.mxu0 0.0
    %1328 = vmatpush.msra.mxu0 0.0
    %1329 = vmatpush.msra.mxu0 0.0
    %1330 = vmatpush.msra.mxu0 0.0
    %1331 = vmatpush.msra.mxu0 0.0
    %1332 = vmatpush.msra.mxu0 0.0
    %1333 = vmatpush.msra.mxu0 0.0
    %1334 = vmatpush.msra.mxu0 0.0
    %1335 = vmatpush.msra.mxu0 0.0
    %1336 = vmatpush.msra.mxu0 0.0
    %1337 = vmatpush.msra.mxu0 0.0
    %1338 = vmatpush.msra.mxu0 0.0
    %1339 = vmatpush.msra.mxu0 %v1320
    %1340 = vmatmul.f32.gmra.mxu0 %v1322
    %v1341 = vpop.f32.mrf.mxu0
    %v1342 = vadd.f32 0.0, %v1341
    %1343 = vdwg.mxu0
    %v1345 = vsel %vm525, %v1319, 0
    %1347 = vmatpush.msra.mxu0 0.0
    %1348 = vmatpush.msra.mxu0 0.0
    %1349 = vmatpush.msra.mxu0 0.0
    %1350 = vmatpush.msra.mxu0 0.0
    %1351 = vmatpush.msra.mxu0 0.0
    %1352 = vmatpush.msra.mxu0 0.0
    %1353 = vmatpush.msra.mxu0 0.0
    %1354 = vmatpush.msra.mxu0 0.0
    %1355 = vmatpush.msra.mxu0 0.0
    %1356 = vmatpush.msra.mxu0 0.0
    %1357 = vmatpush.msra.mxu0 0.0
    %1358 = vmatpush.msra.mxu0 0.0
    %1359 = vmatpush.msra.mxu0 0.0
    %1360 = vmatpush.msra.mxu0 0.0
    %1361 = vmatpush.msra.mxu0 0.0
    %1362 = vmatpush.msra.mxu0 %v1320
    %1363 = vmatmul.f32.gmra.mxu0 %v1345
    %v1364 = vpop.f32.mrf.mxu0
    %v1365 = vadd.f32 0.0, %v1364
    %1366 = vdwg.mxu0
    %v1367 = vperm.slane %v1342, 0
    %v1368 = vmul.f32 %v1214, %v1367
    %v1369 = vmul.f32 %v1215, %v1367
    %v1370 = vmul.f32 %v1216, %v1367
    %v1371 = vmul.f32 %v1217, %v1367
    %v1372 = vperm.slane %v1365, 0
    %v1373 = vadd.f32 %v1368, %v1372
    %v1374 = vadd.f32 %v1369, %v1372
    %v1375 = vadd.f32 %v1370, %v1372
    %v1376 = vadd.f32 %v1371, %v1372
    %v1377 = vadd.f32 %v1218, %v1373
    %v1378 = vadd.f32 %v1219, %v1374
    %v1379 = vadd.f32 %v1220, %v1375
    %v1380 = vadd.f32 %v1221, %v1376
    %v1381 = vmax.f32 %v1377, 0.0
    %v1382 = vmax.f32 %v1378, 0.0
    %v1383 = vmax.f32 %v1379, 0.0
    %v1384 = vmax.f32 %v1380, 0.0
    %1385 = vst [vmem:[#allocation12] sm:$0xff] %v1381
    %1386 = vst [vmem:[#allocation12 + $0x8] sm:$0xff] %v1382
    %1387 = vst [vmem:[#allocation12 + $0x10] sm:$0xff] %v1383
    %1388 = vst [vmem:[#allocation12 + $0x18] sm:$0xff] %v1384
    // Predicated region
    $region86: #{tpu_custom_call.1} parent=1 // pred_check
      _
    $region87: #{tpu_custom_call.1} parent=1 // pred_check_branch
      %1390 = sbr.rel (0) target = $region89
    $region88: #{tpu_custom_call.1} parent=1 // pred_region
      %1392 = vsyncadd [#allocation6], 0
      %s1393 = sshll.u32 [#allocation12], 4
      %s1394 = int_to_ptr.vmem [resolvable:$true] %s1393
      %s1395 = sshll.u32 %s17, 4
      %s1396 = int_to_ptr.hbm [resolvable:$true] %s1395
      %1401 = dma.vmem_to_hbm [thread:$0]  %s1394, 512, %s1396, [#allocation6], 128, 128, 8
    $region89: #{tpu_custom_call.1} parent=1 // pred_fallthru
      _
    // Predicated region
    $region90: #{tpu_custom_call.1} parent=1 // pred_check
      _
    $region91: #{tpu_custom_call.1} parent=1 // pred_check_branch
      %1403 = sbr.rel (0) target = $region93
    $region92: #{tpu_custom_call.1} parent=1 // pred_region
      %1405 = dma.done [#allocation6], 512
    $region93: #{tpu_custom_call.1} parent=1 // pred_fallthru
      _
    %1406 = vsyncpa [#allocation5], 1
    %1407 = vsyncpa [#allocation8], 1
    %1408 = vsyncpa [#allocation11], 1
    %1409 = vsyncpa [#allocation6], 1

</llo_original>
